<compile_context>
chip_gen: v7x
topology: tpu7x:2x2x1
jax: 0.10.0
libtpu: 0.0.40
codegen_flags: <defaults>
</compile_context>

<pallas_src>
import functools

import jax
import jax.numpy as jnp
from jax.experimental import pallas as pl


# ----------------------------- in-kernel helpers ----------------------------

def _layernorm(x, g, b, eps):
    mu = jnp.mean(x, axis=-1, keepdims=True)
    var = jnp.mean((x - mu) ** 2, axis=-1, keepdims=True)
    return (x - mu) * jax.lax.rsqrt(var + eps) * g + b


def _mxu(a_f32, w_bf16):
    # bf16 MXU operands, f32 accumulation (weights are stored bf16 in HBM).
    return jnp.dot(a_f32.astype(jnp.bfloat16), w_bf16,
                   preferred_element_type=jnp.float32)


# --------------------------- fused encoder kernel ---------------------------

def encoder_kernel(emb_ref, bias_ref, emb_ln_g_ref, emb_ln_b_ref,
                   wqkv_ref, bqkv_ref, wo_ref, bo_ref,
                   ln1_g_ref, ln1_b_ref, wi_ref, bi_ref,
                   w2_ref, b2_ref, ln2_g_ref, ln2_b_ref,
                   pool_w_ref, pool_b_ref,
                   out_ref,
                   *, B, S, H, nH, Dh, num_layers, scale, eps):
    """Single program: embedding LN + all layers + pooler; state lives in vregs."""

    # ---- embedding LayerNorm (no residual / no zero tensor) ----
    x = _layernorm(emb_ref[...], emb_ln_g_ref[...], emb_ln_b_ref[...], eps)  # (B*S, H)

    # Hoisted additive attention-mask bias, built once in the wrapper.
    bias = bias_ref[...]                                            # (B, 1, S)

    # ---- static unroll over layers; weights indexed from resident stacks ----
    for l in range(num_layers):
        # fused QKV projection: one (H, 3H) matmul
        qkv = _mxu(x, wqkv_ref[l]) + bqkv_ref[l]                    # (B*S, 3H)

        # self-attention: batched over B via einsum; tiny static loop over heads
        ctx_heads = []
        for h in range(nH):
            q = qkv[:, h * Dh:(h + 1) * Dh].reshape(B, S, Dh)
            k = qkv[:, H + h * Dh:H + (h + 1) * Dh].reshape(B, S, Dh)
            v = qkv[:, 2 * H + h * Dh:2 * H + (h + 1) * Dh].reshape(B, S, Dh)

            s = jnp.einsum('bqd,bkd->bqk', q, k,
                           preferred_element_type=jnp.float32) * scale + bias  # (B,S,S)
            m = jnp.max(s, axis=-1, keepdims=True)
            p = jnp.exp(s - m)
            p = p * pl.reciprocal(jnp.sum(p, axis=-1, keepdims=True), approx=True)
            ctx_h = jnp.einsum('bqk,bkd->bqd', p, v,
                               preferred_element_type=jnp.float32)              # (B,S,Dh)
            ctx_heads.append(ctx_h.reshape(B * S, Dh))
        ctx = jnp.concatenate(ctx_heads, axis=-1)                   # (B*S, H)

        # attention output projection + residual LayerNorm
        attn_out = _mxu(ctx, wo_ref[l]) + bo_ref[l]
        h1 = _layernorm(attn_out + x, ln1_g_ref[l], ln1_b_ref[l], eps)

        # feed-forward + residual LayerNorm
        ffn = _mxu(h1, wi_ref[l]) + bi_ref[l]
        # TODO(synk): HF BERT uses exact (erf) GELU; tanh approximation kept
        # here for robust Mosaic lowering.
        ffn = jax.nn.gelu(ffn, approximate=True)
        ffn_out = _mxu(ffn, w2_ref[l]) + b2_ref[l]
        x = _layernorm(ffn_out + h1, ln2_g_ref[l], ln2_b_ref[l], eps)

    # ---- pooler on the CLS rows: zero-cost view + row-0 select ----
    cls = x.reshape(B, S, H)[:, 0, :]                               # (B, H)
    pooled = jnp.tanh(_mxu(cls, pool_w_ref[...]) + pool_b_ref[...])
    out_ref[...] = pooled.astype(out_ref.dtype)


# --------------------------- synthetic BERT model ---------------------------

class Config:
    vocab_size = 64
    hidden = 32
    num_heads = 2
    head_dim = 16          # hidden // num_heads
    intermediate = 64
    num_layers = 2
    max_pos = 16
    type_vocab = 2


def init_params(key, cfg):
    """Deterministic synthetic BERT parameters (std=0.02, like BERT init)."""
    H, I, L = cfg.hidden, cfg.intermediate, cfg.num_layers

    def nxt():
        nonlocal key
        key, sub = jax.random.split(key)
        return sub

    def rnd(shape):
        return 0.02 * jax.random.normal(nxt(), shape, jnp.float32)

    p = {
        "word_emb": rnd((cfg.vocab_size, H)),
        "pos_emb": rnd((cfg.max_pos, H)),
        "type_emb": rnd((cfg.type_vocab, H)),
        "emb_ln_g": jnp.ones((1, H), jnp.float32),
        "emb_ln_b": jnp.zeros((1, H), jnp.float32),
    }

    wqkv, wo, wi, w2 = [], [], [], []
    for _ in range(L):
        wqkv.append(jnp.concatenate([rnd((H, H)), rnd((H, H)), rnd((H, H))],
                                    axis=1))                         # (H, 3H)
        wo.append(rnd((H, H)))
        wi.append(rnd((H, I)))
        w2.append(rnd((I, H)))

    # Stacked per-layer params; matmul weights stored bf16 (halves HBM traffic).
    p["wqkv"] = jnp.stack(wqkv).astype(jnp.bfloat16)                 # (L, H, 3H)
    p["bqkv"] = jnp.zeros((L, 1, 3 * H), jnp.float32)
    p["wo"] = jnp.stack(wo).astype(jnp.bfloat16)                     # (L, H, H)
    p["bo"] = jnp.zeros((L, 1, H), jnp.float32)
    p["ln1_g"] = jnp.ones((L, 1, H), jnp.float32)
    p["ln1_b"] = jnp.zeros((L, 1, H), jnp.float32)
    p["wi"] = jnp.stack(wi).astype(jnp.bfloat16)                     # (L, H, I)
    p["bi"] = jnp.zeros((L, 1, I), jnp.float32)
    p["w2"] = jnp.stack(w2).astype(jnp.bfloat16)                     # (L, I, H)
    p["b2"] = jnp.zeros((L, 1, H), jnp.float32)
    p["ln2_g"] = jnp.ones((L, 1, H), jnp.float32)
    p["ln2_b"] = jnp.zeros((L, 1, H), jnp.float32)
    p["pool_w"] = rnd((H, H)).astype(jnp.bfloat16)
    p["pool_b"] = jnp.zeros((1, H), jnp.float32)
    return p


def text_encoder_forward(params, input_ids, attention_mask, cfg):
    """Equivalent of TextEncoder.forward: returns BERT pooler_output (B, H)."""
    B, S = input_ids.shape
    H, nH, Dh, L = cfg.hidden, cfg.num_heads, cfg.head_dim, cfg.num_layers

    # Embedding gather / add is glue; everything downstream is ONE kernel,
    # ONE program.  token_type_ids default to 0 (as in the reference module).
    emb = (jnp.take(params["word_emb"], input_ids, axis=0)
           + params["pos_emb"][:S][None, :, :]
           + params["type_emb"][0][None, None, :])                   # (B, S, H)
    emb = emb.reshape(B * S, H).astype(jnp.float32)

    # Hoisted additive attention-mask bias, computed once here.
    bias = ((1.0 - attention_mask.astype(jnp.float32)) * -10000.0
            ).reshape(B, 1, S)

    kern = functools.partial(
        encoder_kernel, B=B, S=S, H=H, nH=nH, Dh=Dh,
        num_layers=L, scale=1.0 / (Dh ** 0.5), eps=1e-12)

    # No grid: single program, whole-array VMEM blocks for every operand
    # (total weights here are a few KiB -- trivially resident).
    return pl.pallas_call(
        kern,
        out_shape=jax.ShapeDtypeStruct((B, H), jnp.float32),
    )(emb, bias, params["emb_ln_g"], params["emb_ln_b"],
      params["wqkv"], params["bqkv"], params["wo"], params["bo"],
      params["ln1_g"], params["ln1_b"], params["wi"], params["bi"],
      params["w2"], params["b2"], params["ln2_g"], params["ln2_b"],
      params["pool_w"], params["pool_b"])


# ---------------------------------- main ------------------------------------

if __name__ == "__main__":
    cfg = Config()
    key = jax.random.PRNGKey(0)
    k_param, k_ids = jax.random.split(key)

    params = init_params(k_param, cfg)

    B, S = 2, 8
    input_ids = jax.random.randint(k_ids, (B, S), 0, cfg.vocab_size,
                                   dtype=jnp.int32)
    # mask out the last 2 tokens of the second example
    attention_mask = jnp.ones((B, S), dtype=jnp.int32).at[1, -2:].set(0)

    fwd = jax.jit(functools.partial(text_encoder_forward, cfg=cfg))
    pooler_output = jax.block_until_ready(fwd(params, input_ids, attention_mask))

    assert pooler_output.shape == (B, cfg.hidden)
    assert pooler_output.dtype == jnp.float32
    assert bool(jnp.all(jnp.isfinite(pooler_output)))
    print("KERNEL_OK")
</pallas_src>

<mosaic_0001>
module attributes {stable_mosaic.version = 11 : i64} {
  func.func @encoder_kernel(%arg0: memref<16x32xf32, #tpu.memory_space<vmem>>, %arg1: memref<2x1x8xf32, #tpu.memory_space<vmem>>, %arg2: memref<1x32xf32, #tpu.memory_space<vmem>>, %arg3: memref<1x32xf32, #tpu.memory_space<vmem>>, %arg4: memref<2x32x96xbf16, #tpu.memory_space<vmem>>, %arg5: memref<2x1x96xf32, #tpu.memory_space<vmem>>, %arg6: memref<2x32x32xbf16, #tpu.memory_space<vmem>>, %arg7: memref<2x1x32xf32, #tpu.memory_space<vmem>>, %arg8: memref<2x1x32xf32, #tpu.memory_space<vmem>>, %arg9: memref<2x1x32xf32, #tpu.memory_space<vmem>>, %arg10: memref<2x32x64xbf16, #tpu.memory_space<vmem>>, %arg11: memref<2x1x64xf32, #tpu.memory_space<vmem>>, %arg12: memref<2x64x32xbf16, #tpu.memory_space<vmem>>, %arg13: memref<2x1x32xf32, #tpu.memory_space<vmem>>, %arg14: memref<2x1x32xf32, #tpu.memory_space<vmem>>, %arg15: memref<2x1x32xf32, #tpu.memory_space<vmem>>, %arg16: memref<32x32xbf16, #tpu.memory_space<vmem>>, %arg17: memref<1x32xf32, #tpu.memory_space<vmem>>, %arg18: memref<2x32xf32, #tpu.memory_space<vmem>>) attributes {dimension_semantics = [], scalar_prefetch = 0 : i64, scratch_operands = 0 : i64, tpu.core_type = #tpu.core_type<tc>} {
    %c0 = arith.constant 0 : index
    %c0_0 = arith.constant 0 : index
    %0 = vector.load %arg0[%c0, %c0_0] : memref<16x32xf32, #tpu.memory_space<vmem>>, vector<16x32xf32>
    %c0_1 = arith.constant 0 : index
    %c0_2 = arith.constant 0 : index
    %1 = vector.load %arg2[%c0_1, %c0_2] : memref<1x32xf32, #tpu.memory_space<vmem>>, vector<1x32xf32>
    %c0_3 = arith.constant 0 : index
    %c0_4 = arith.constant 0 : index
    %2 = vector.load %arg3[%c0_3, %c0_4] : memref<1x32xf32, #tpu.memory_space<vmem>>, vector<1x32xf32>
    %cst = arith.constant dense<0.000000e+00> : vector<16xf32>
    %3 = vector.multi_reduction <add>, %0, %cst [1] : vector<16x32xf32> to vector<16xf32>
    %4 = vector.shape_cast %3 : vector<16xf32> to vector<16x1xf32>
    %cst_5 = arith.constant 3.200000e+01 : f32
    %5 = vector.broadcast %cst_5 : f32 to vector<16x1xf32>
    %6 = arith.divf %4, %5 : vector<16x1xf32>
    %7 = vector.broadcast %6 : vector<16x1xf32> to vector<16x32xf32>
    %8 = arith.subf %0, %7 : vector<16x32xf32>
    %9 = arith.mulf %8, %8 : vector<16x32xf32>
    %cst_6 = arith.constant dense<0.000000e+00> : vector<16xf32>
    %10 = vector.multi_reduction <add>, %9, %cst_6 [1] : vector<16x32xf32> to vector<16xf32>
    %11 = vector.shape_cast %10 : vector<16xf32> to vector<16x1xf32>
    %cst_7 = arith.constant 3.200000e+01 : f32
    %12 = vector.broadcast %cst_7 : f32 to vector<16x1xf32>
    %13 = arith.divf %11, %12 : vector<16x1xf32>
    %14 = vector.broadcast %6 : vector<16x1xf32> to vector<16x32xf32>
    %15 = arith.subf %0, %14 : vector<16x32xf32>
    %cst_8 = arith.constant 9.99999996E-13 : f32
    %16 = vector.broadcast %cst_8 : f32 to vector<16x1xf32>
    %17 = arith.addf %13, %16 : vector<16x1xf32>
    %18 = math.rsqrt %17 : vector<16x1xf32>
    %19 = vector.broadcast %18 : vector<16x1xf32> to vector<16x32xf32>
    %20 = arith.mulf %15, %19 : vector<16x32xf32>
    %21 = vector.broadcast %1 : vector<1x32xf32> to vector<16x32xf32>
    %22 = arith.mulf %20, %21 : vector<16x32xf32>
    %23 = vector.broadcast %2 : vector<1x32xf32> to vector<16x32xf32>
    %24 = arith.addf %22, %23 : vector<16x32xf32>
    %c0_9 = arith.constant 0 : index
    %c0_10 = arith.constant 0 : index
    %c0_11 = arith.constant 0 : index
    %25 = vector.load %arg1[%c0_9, %c0_10, %c0_11] : memref<2x1x8xf32, #tpu.memory_space<vmem>>, vector<2x1x8xf32>
    %c0_12 = arith.constant 0 : index
    %c0_13 = arith.constant 0 : index
    %c0_14 = arith.constant 0 : index
    %26 = vector.load %arg4[%c0_12, %c0_13, %c0_14] : memref<2x32x96xbf16, #tpu.memory_space<vmem>>, vector<1x32x96xbf16>
    %27 = vector.shape_cast %26 : vector<1x32x96xbf16> to vector<32x96xbf16>
    %28 = arith.truncf %24 : vector<16x32xf32> to vector<16x32xbf16>
    %cst_15 = arith.constant dense<0.000000e+00> : vector<16x96xf32>
    %29 = tpu.matmul %28, %27, %cst_15 {dimension_numbers = #tpu.dot_dimension_numbers<[1], [0], [0], [1], [0, 0, 1, 1], [], []>} : vector<16x32xbf16>, vector<32x96xbf16>, vector<16x96xf32> -> vector<16x96xf32>
    %c0_16 = arith.constant 0 : index
    %c0_17 = arith.constant 0 : index
    %c0_18 = arith.constant 0 : index
    %30 = vector.load %arg5[%c0_16, %c0_17, %c0_18] : memref<2x1x96xf32, #tpu.memory_space<vmem>>, vector<1x1x96xf32>
    %31 = vector.shape_cast %30 : vector<1x1x96xf32> to vector<1x96xf32>
    %32 = vector.broadcast %31 : vector<1x96xf32> to vector<16x96xf32>
    %33 = arith.addf %29, %32 : vector<16x96xf32>
    %34 = vector.extract_strided_slice %33 {offsets = [0, 0], sizes = [16, 16], strides = [1, 1]} : vector<16x96xf32> to vector<16x16xf32>
    %35 = vector.shape_cast %34 : vector<16x16xf32> to vector<2x8x16xf32>
    %36 = vector.extract_strided_slice %33 {offsets = [0, 32], sizes = [16, 16], strides = [1, 1]} : vector<16x96xf32> to vector<16x16xf32>
    %37 = vector.shape_cast %36 : vector<16x16xf32> to vector<2x8x16xf32>
    %38 = vector.extract_strided_slice %33 {offsets = [0, 64], sizes = [16, 16], strides = [1, 1]} : vector<16x96xf32> to vector<16x16xf32>
    %39 = vector.shape_cast %38 : vector<16x16xf32> to vector<2x8x16xf32>
    "tpu.trace_start"() <{level = 10 : i32, message = "bqd,bkd->bqk"}> : () -> ()
    %cst_19 = arith.constant dense<0.000000e+00> : vector<2x8x8xf32>
    %40 = tpu.matmul %35, %37, %cst_19 {dimension_numbers = #tpu.dot_dimension_numbers<[2], [2], [1], [1], [0, 0, 0, 1, 1, 1], [0], [0]>} : vector<2x8x16xf32>, vector<2x8x16xf32>, vector<2x8x8xf32> -> vector<2x8x8xf32>
    "tpu.trace_stop"() : () -> ()
    %cst_20 = arith.constant 2.500000e-01 : f32
    %41 = vector.broadcast %cst_20 : f32 to vector<2x8x8xf32>
    %42 = arith.mulf %40, %41 : vector<2x8x8xf32>
    %43 = vector.broadcast %25 : vector<2x1x8xf32> to vector<2x8x8xf32>
    %44 = arith.addf %42, %43 : vector<2x8x8xf32>
    %cst_21 = arith.constant dense<0xFF800000> : vector<2x8xf32>
    %45 = vector.multi_reduction <maximumf>, %44, %cst_21 [2] : vector<2x8x8xf32> to vector<2x8xf32>
    %46 = vector.shape_cast %45 : vector<2x8xf32> to vector<2x8x1xf32>
    %47 = vector.broadcast %46 : vector<2x8x1xf32> to vector<2x8x8xf32>
    %48 = arith.subf %44, %47 : vector<2x8x8xf32>
    %49 = math.exp %48 : vector<2x8x8xf32>
    %cst_22 = arith.constant dense<0.000000e+00> : vector<2x8xf32>
    %50 = vector.multi_reduction <add>, %49, %cst_22 [2] : vector<2x8x8xf32> to vector<2x8xf32>
    %51 = vector.shape_cast %50 : vector<2x8xf32> to vector<2x8x1xf32>
    %52 = tpu.reciprocal %51 {approx = true} : vector<2x8x1xf32> -> vector<2x8x1xf32>
    %53 = vector.broadcast %52 : vector<2x8x1xf32> to vector<2x8x8xf32>
    %54 = arith.mulf %49, %53 : vector<2x8x8xf32>
    "tpu.trace_start"() <{level = 10 : i32, message = "bqk,bkd->bqd"}> : () -> ()
    %cst_23 = arith.constant dense<0.000000e+00> : vector<2x8x16xf32>
    %55 = tpu.matmul %54, %39, %cst_23 {dimension_numbers = #tpu.dot_dimension_numbers<[2], [1], [1], [2], [0, 0, 0, 1, 1, 2], [0], [0]>} : vector<2x8x8xf32>, vector<2x8x16xf32>, vector<2x8x16xf32> -> vector<2x8x16xf32>
    "tpu.trace_stop"() : () -> ()
    %56 = vector.shape_cast %55 : vector<2x8x16xf32> to vector<16x16xf32>
    %57 = vector.extract_strided_slice %33 {offsets = [0, 16], sizes = [16, 16], strides = [1, 1]} : vector<16x96xf32> to vector<16x16xf32>
    %58 = vector.shape_cast %57 : vector<16x16xf32> to vector<2x8x16xf32>
    %59 = vector.extract_strided_slice %33 {offsets = [0, 48], sizes = [16, 16], strides = [1, 1]} : vector<16x96xf32> to vector<16x16xf32>
    %60 = vector.shape_cast %59 : vector<16x16xf32> to vector<2x8x16xf32>
    %61 = vector.extract_strided_slice %33 {offsets = [0, 80], sizes = [16, 16], strides = [1, 1]} : vector<16x96xf32> to vector<16x16xf32>
    %62 = vector.shape_cast %61 : vector<16x16xf32> to vector<2x8x16xf32>
    "tpu.trace_start"() <{level = 10 : i32, message = "bqd,bkd->bqk"}> : () -> ()
    %cst_24 = arith.constant dense<0.000000e+00> : vector<2x8x8xf32>
    %63 = tpu.matmul %58, %60, %cst_24 {dimension_numbers = #tpu.dot_dimension_numbers<[2], [2], [1], [1], [0, 0, 0, 1, 1, 1], [0], [0]>} : vector<2x8x16xf32>, vector<2x8x16xf32>, vector<2x8x8xf32> -> vector<2x8x8xf32>
    "tpu.trace_stop"() : () -> ()
    %cst_25 = arith.constant 2.500000e-01 : f32
    %64 = vector.broadcast %cst_25 : f32 to vector<2x8x8xf32>
    %65 = arith.mulf %63, %64 : vector<2x8x8xf32>
    %66 = vector.broadcast %25 : vector<2x1x8xf32> to vector<2x8x8xf32>
    %67 = arith.addf %65, %66 : vector<2x8x8xf32>
    %cst_26 = arith.constant dense<0xFF800000> : vector<2x8xf32>
    %68 = vector.multi_reduction <maximumf>, %67, %cst_26 [2] : vector<2x8x8xf32> to vector<2x8xf32>
    %69 = vector.shape_cast %68 : vector<2x8xf32> to vector<2x8x1xf32>
    %70 = vector.broadcast %69 : vector<2x8x1xf32> to vector<2x8x8xf32>
    %71 = arith.subf %67, %70 : vector<2x8x8xf32>
    %72 = math.exp %71 : vector<2x8x8xf32>
    %cst_27 = arith.constant dense<0.000000e+00> : vector<2x8xf32>
    %73 = vector.multi_reduction <add>, %72, %cst_27 [2] : vector<2x8x8xf32> to vector<2x8xf32>
    %74 = vector.shape_cast %73 : vector<2x8xf32> to vector<2x8x1xf32>
    %75 = tpu.reciprocal %74 {approx = true} : vector<2x8x1xf32> -> vector<2x8x1xf32>
    %76 = vector.broadcast %75 : vector<2x8x1xf32> to vector<2x8x8xf32>
    %77 = arith.mulf %72, %76 : vector<2x8x8xf32>
    "tpu.trace_start"() <{level = 10 : i32, message = "bqk,bkd->bqd"}> : () -> ()
    %cst_28 = arith.constant dense<0.000000e+00> : vector<2x8x16xf32>
    %78 = tpu.matmul %77, %62, %cst_28 {dimension_numbers = #tpu.dot_dimension_numbers<[2], [1], [1], [2], [0, 0, 0, 1, 1, 2], [0], [0]>} : vector<2x8x8xf32>, vector<2x8x16xf32>, vector<2x8x16xf32> -> vector<2x8x16xf32>
    "tpu.trace_stop"() : () -> ()
    %79 = vector.shape_cast %78 : vector<2x8x16xf32> to vector<16x16xf32>
    %80 = tpu.concatenate %56, %79 in 1 : vector<16x16xf32>, vector<16x16xf32> -> vector<16x32xf32>
    %c0_29 = arith.constant 0 : index
    %c0_30 = arith.constant 0 : index
    %c0_31 = arith.constant 0 : index
    %81 = vector.load %arg6[%c0_29, %c0_30, %c0_31] : memref<2x32x32xbf16, #tpu.memory_space<vmem>>, vector<1x32x32xbf16>
    %82 = vector.shape_cast %81 : vector<1x32x32xbf16> to vector<32x32xbf16>
    %83 = arith.truncf %80 : vector<16x32xf32> to vector<16x32xbf16>
    %cst_32 = arith.constant dense<0.000000e+00> : vector<16x32xf32>
    %84 = tpu.matmul %83, %82, %cst_32 {dimension_numbers = #tpu.dot_dimension_numbers<[1], [0], [0], [1], [0, 0, 1, 1], [], []>} : vector<16x32xbf16>, vector<32x32xbf16>, vector<16x32xf32> -> vector<16x32xf32>
    %c0_33 = arith.constant 0 : index
    %c0_34 = arith.constant 0 : index
    %c0_35 = arith.constant 0 : index
    %85 = vector.load %arg7[%c0_33, %c0_34, %c0_35] : memref<2x1x32xf32, #tpu.memory_space<vmem>>, vector<1x1x32xf32>
    %86 = vector.shape_cast %85 : vector<1x1x32xf32> to vector<1x32xf32>
    %87 = vector.broadcast %86 : vector<1x32xf32> to vector<16x32xf32>
    %88 = arith.addf %84, %87 : vector<16x32xf32>
    %89 = arith.addf %88, %24 : vector<16x32xf32>
    %c0_36 = arith.constant 0 : index
    %c0_37 = arith.constant 0 : index
    %c0_38 = arith.constant 0 : index
    %90 = vector.load %arg8[%c0_36, %c0_37, %c0_38] : memref<2x1x32xf32, #tpu.memory_space<vmem>>, vector<1x1x32xf32>
    %91 = vector.shape_cast %90 : vector<1x1x32xf32> to vector<1x32xf32>
    %c0_39 = arith.constant 0 : index
    %c0_40 = arith.constant 0 : index
    %c0_41 = arith.constant 0 : index
    %92 = vector.load %arg9[%c0_39, %c0_40, %c0_41] : memref<2x1x32xf32, #tpu.memory_space<vmem>>, vector<1x1x32xf32>
    %93 = vector.shape_cast %92 : vector<1x1x32xf32> to vector<1x32xf32>
    %cst_42 = arith.constant dense<0.000000e+00> : vector<16xf32>
    %94 = vector.multi_reduction <add>, %89, %cst_42 [1] : vector<16x32xf32> to vector<16xf32>
    %95 = vector.shape_cast %94 : vector<16xf32> to vector<16x1xf32>
    %cst_43 = arith.constant 3.200000e+01 : f32
    %96 = vector.broadcast %cst_43 : f32 to vector<16x1xf32>
    %97 = arith.divf %95, %96 : vector<16x1xf32>
    %98 = vector.broadcast %97 : vector<16x1xf32> to vector<16x32xf32>
    %99 = arith.subf %89, %98 : vector<16x32xf32>
    %100 = arith.mulf %99, %99 : vector<16x32xf32>
    %cst_44 = arith.constant dense<0.000000e+00> : vector<16xf32>
    %101 = vector.multi_reduction <add>, %100, %cst_44 [1] : vector<16x32xf32> to vector<16xf32>
    %102 = vector.shape_cast %101 : vector<16xf32> to vector<16x1xf32>
    %cst_45 = arith.constant 3.200000e+01 : f32
    %103 = vector.broadcast %cst_45 : f32 to vector<16x1xf32>
    %104 = arith.divf %102, %103 : vector<16x1xf32>
    %105 = vector.broadcast %97 : vector<16x1xf32> to vector<16x32xf32>
    %106 = arith.subf %89, %105 : vector<16x32xf32>
    %cst_46 = arith.constant 9.99999996E-13 : f32
    %107 = vector.broadcast %cst_46 : f32 to vector<16x1xf32>
    %108 = arith.addf %104, %107 : vector<16x1xf32>
    %109 = math.rsqrt %108 : vector<16x1xf32>
    %110 = vector.broadcast %109 : vector<16x1xf32> to vector<16x32xf32>
    %111 = arith.mulf %106, %110 : vector<16x32xf32>
    %112 = vector.broadcast %91 : vector<1x32xf32> to vector<16x32xf32>
    %113 = arith.mulf %111, %112 : vector<16x32xf32>
    %114 = vector.broadcast %93 : vector<1x32xf32> to vector<16x32xf32>
    %115 = arith.addf %113, %114 : vector<16x32xf32>
    %c0_47 = arith.constant 0 : index
    %c0_48 = arith.constant 0 : index
    %c0_49 = arith.constant 0 : index
    %116 = vector.load %arg10[%c0_47, %c0_48, %c0_49] : memref<2x32x64xbf16, #tpu.memory_space<vmem>>, vector<1x32x64xbf16>
    %117 = vector.shape_cast %116 : vector<1x32x64xbf16> to vector<32x64xbf16>
    %118 = arith.truncf %115 : vector<16x32xf32> to vector<16x32xbf16>
    %cst_50 = arith.constant dense<0.000000e+00> : vector<16x64xf32>
    %119 = tpu.matmul %118, %117, %cst_50 {dimension_numbers = #tpu.dot_dimension_numbers<[1], [0], [0], [1], [0, 0, 1, 1], [], []>} : vector<16x32xbf16>, vector<32x64xbf16>, vector<16x64xf32> -> vector<16x64xf32>
    %c0_51 = arith.constant 0 : index
    %c0_52 = arith.constant 0 : index
    %c0_53 = arith.constant 0 : index
    %120 = vector.load %arg11[%c0_51, %c0_52, %c0_53] : memref<2x1x64xf32, #tpu.memory_space<vmem>>, vector<1x1x64xf32>
    %121 = vector.shape_cast %120 : vector<1x1x64xf32> to vector<1x64xf32>
    %122 = vector.broadcast %121 : vector<1x64xf32> to vector<16x64xf32>
    %123 = arith.addf %119, %122 : vector<16x64xf32>
    %124 = arith.mulf %123, %123 : vector<16x64xf32>
    %125 = arith.mulf %123, %124 : vector<16x64xf32>
    %cst_54 = arith.constant 4.471500e-02 : f32
    %126 = vector.broadcast %cst_54 : f32 to vector<16x64xf32>
    %127 = arith.mulf %126, %125 : vector<16x64xf32>
    %128 = arith.addf %123, %127 : vector<16x64xf32>
    %cst_55 = arith.constant 0.797884583 : f32
    %129 = vector.broadcast %cst_55 : f32 to vector<16x64xf32>
    %130 = arith.mulf %129, %128 : vector<16x64xf32>
    %131 = math.tanh %130 : vector<16x64xf32>
    %cst_56 = arith.constant 1.000000e+00 : f32
    %132 = vector.broadcast %cst_56 : f32 to vector<16x64xf32>
    %133 = arith.addf %132, %131 : vector<16x64xf32>
    %cst_57 = arith.constant 5.000000e-01 : f32
    %134 = vector.broadcast %cst_57 : f32 to vector<16x64xf32>
    %135 = arith.mulf %134, %133 : vector<16x64xf32>
    %136 = arith.mulf %123, %135 : vector<16x64xf32>
    %c0_58 = arith.constant 0 : index
    %c0_59 = arith.constant 0 : index
    %c0_60 = arith.constant 0 : index
    %137 = vector.load %arg12[%c0_58, %c0_59, %c0_60] : memref<2x64x32xbf16, #tpu.memory_space<vmem>>, vector<1x64x32xbf16>
    %138 = vector.shape_cast %137 : vector<1x64x32xbf16> to vector<64x32xbf16>
    %139 = arith.truncf %136 : vector<16x64xf32> to vector<16x64xbf16>
    %cst_61 = arith.constant dense<0.000000e+00> : vector<16x32xf32>
    %140 = tpu.matmul %139, %138, %cst_61 {dimension_numbers = #tpu.dot_dimension_numbers<[1], [0], [0], [1], [0, 0, 1, 1], [], []>} : vector<16x64xbf16>, vector<64x32xbf16>, vector<16x32xf32> -> vector<16x32xf32>
    %c0_62 = arith.constant 0 : index
    %c0_63 = arith.constant 0 : index
    %c0_64 = arith.constant 0 : index
    %141 = vector.load %arg13[%c0_62, %c0_63, %c0_64] : memref<2x1x32xf32, #tpu.memory_space<vmem>>, vector<1x1x32xf32>
    %142 = vector.shape_cast %141 : vector<1x1x32xf32> to vector<1x32xf32>
    %143 = vector.broadcast %142 : vector<1x32xf32> to vector<16x32xf32>
    %144 = arith.addf %140, %143 : vector<16x32xf32>
    %145 = arith.addf %144, %115 : vector<16x32xf32>
    %c0_65 = arith.constant 0 : index
    %c0_66 = arith.constant 0 : index
    %c0_67 = arith.constant 0 : index
    %146 = vector.load %arg14[%c0_65, %c0_66, %c0_67] : memref<2x1x32xf32, #tpu.memory_space<vmem>>, vector<1x1x32xf32>
    %147 = vector.shape_cast %146 : vector<1x1x32xf32> to vector<1x32xf32>
    %c0_68 = arith.constant 0 : index
    %c0_69 = arith.constant 0 : index
    %c0_70 = arith.constant 0 : index
    %148 = vector.load %arg15[%c0_68, %c0_69, %c0_70] : memref<2x1x32xf32, #tpu.memory_space<vmem>>, vector<1x1x32xf32>
    %149 = vector.shape_cast %148 : vector<1x1x32xf32> to vector<1x32xf32>
    %cst_71 = arith.constant dense<0.000000e+00> : vector<16xf32>
    %150 = vector.multi_reduction <add>, %145, %cst_71 [1] : vector<16x32xf32> to vector<16xf32>
    %151 = vector.shape_cast %150 : vector<16xf32> to vector<16x1xf32>
    %cst_72 = arith.constant 3.200000e+01 : f32
    %152 = vector.broadcast %cst_72 : f32 to vector<16x1xf32>
    %153 = arith.divf %151, %152 : vector<16x1xf32>
    %154 = vector.broadcast %153 : vector<16x1xf32> to vector<16x32xf32>
    %155 = arith.subf %145, %154 : vector<16x32xf32>
    %156 = arith.mulf %155, %155 : vector<16x32xf32>
    %cst_73 = arith.constant dense<0.000000e+00> : vector<16xf32>
    %157 = vector.multi_reduction <add>, %156, %cst_73 [1] : vector<16x32xf32> to vector<16xf32>
    %158 = vector.shape_cast %157 : vector<16xf32> to vector<16x1xf32>
    %cst_74 = arith.constant 3.200000e+01 : f32
    %159 = vector.broadcast %cst_74 : f32 to vector<16x1xf32>
    %160 = arith.divf %158, %159 : vector<16x1xf32>
    %161 = vector.broadcast %153 : vector<16x1xf32> to vector<16x32xf32>
    %162 = arith.subf %145, %161 : vector<16x32xf32>
    %cst_75 = arith.constant 9.99999996E-13 : f32
    %163 = vector.broadcast %cst_75 : f32 to vector<16x1xf32>
    %164 = arith.addf %160, %163 : vector<16x1xf32>
    %165 = math.rsqrt %164 : vector<16x1xf32>
    %166 = vector.broadcast %165 : vector<16x1xf32> to vector<16x32xf32>
    %167 = arith.mulf %162, %166 : vector<16x32xf32>
    %168 = vector.broadcast %147 : vector<1x32xf32> to vector<16x32xf32>
    %169 = arith.mulf %167, %168 : vector<16x32xf32>
    %170 = vector.broadcast %149 : vector<1x32xf32> to vector<16x32xf32>
    %171 = arith.addf %169, %170 : vector<16x32xf32>
    %c1 = arith.constant 1 : index
    %c0_76 = arith.constant 0 : index
    %c0_77 = arith.constant 0 : index
    %172 = vector.load %arg4[%c1, %c0_76, %c0_77] : memref<2x32x96xbf16, #tpu.memory_space<vmem>>, vector<1x32x96xbf16>
    %173 = vector.shape_cast %172 : vector<1x32x96xbf16> to vector<32x96xbf16>
    %174 = arith.truncf %171 : vector<16x32xf32> to vector<16x32xbf16>
    %cst_78 = arith.constant dense<0.000000e+00> : vector<16x96xf32>
    %175 = tpu.matmul %174, %173, %cst_78 {dimension_numbers = #tpu.dot_dimension_numbers<[1], [0], [0], [1], [0, 0, 1, 1], [], []>} : vector<16x32xbf16>, vector<32x96xbf16>, vector<16x96xf32> -> vector<16x96xf32>
    %c1_79 = arith.constant 1 : index
    %c0_80 = arith.constant 0 : index
    %c0_81 = arith.constant 0 : index
    %176 = vector.load %arg5[%c1_79, %c0_80, %c0_81] : memref<2x1x96xf32, #tpu.memory_space<vmem>>, vector<1x1x96xf32>
    %177 = vector.shape_cast %176 : vector<1x1x96xf32> to vector<1x96xf32>
    %178 = vector.broadcast %177 : vector<1x96xf32> to vector<16x96xf32>
    %179 = arith.addf %175, %178 : vector<16x96xf32>
    %180 = vector.extract_strided_slice %179 {offsets = [0, 0], sizes = [16, 16], strides = [1, 1]} : vector<16x96xf32> to vector<16x16xf32>
    %181 = vector.shape_cast %180 : vector<16x16xf32> to vector<2x8x16xf32>
    %182 = vector.extract_strided_slice %179 {offsets = [0, 32], sizes = [16, 16], strides = [1, 1]} : vector<16x96xf32> to vector<16x16xf32>
    %183 = vector.shape_cast %182 : vector<16x16xf32> to vector<2x8x16xf32>
    %184 = vector.extract_strided_slice %179 {offsets = [0, 64], sizes = [16, 16], strides = [1, 1]} : vector<16x96xf32> to vector<16x16xf32>
    %185 = vector.shape_cast %184 : vector<16x16xf32> to vector<2x8x16xf32>
    "tpu.trace_start"() <{level = 10 : i32, message = "bqd,bkd->bqk"}> : () -> ()
    %cst_82 = arith.constant dense<0.000000e+00> : vector<2x8x8xf32>
    %186 = tpu.matmul %181, %183, %cst_82 {dimension_numbers = #tpu.dot_dimension_numbers<[2], [2], [1], [1], [0, 0, 0, 1, 1, 1], [0], [0]>} : vector<2x8x16xf32>, vector<2x8x16xf32>, vector<2x8x8xf32> -> vector<2x8x8xf32>
    "tpu.trace_stop"() : () -> ()
    %cst_83 = arith.constant 2.500000e-01 : f32
    %187 = vector.broadcast %cst_83 : f32 to vector<2x8x8xf32>
    %188 = arith.mulf %186, %187 : vector<2x8x8xf32>
    %189 = vector.broadcast %25 : vector<2x1x8xf32> to vector<2x8x8xf32>
    %190 = arith.addf %188, %189 : vector<2x8x8xf32>
    %cst_84 = arith.constant dense<0xFF800000> : vector<2x8xf32>
    %191 = vector.multi_reduction <maximumf>, %190, %cst_84 [2] : vector<2x8x8xf32> to vector<2x8xf32>
    %192 = vector.shape_cast %191 : vector<2x8xf32> to vector<2x8x1xf32>
    %193 = vector.broadcast %192 : vector<2x8x1xf32> to vector<2x8x8xf32>
    %194 = arith.subf %190, %193 : vector<2x8x8xf32>
    %195 = math.exp %194 : vector<2x8x8xf32>
    %cst_85 = arith.constant dense<0.000000e+00> : vector<2x8xf32>
    %196 = vector.multi_reduction <add>, %195, %cst_85 [2] : vector<2x8x8xf32> to vector<2x8xf32>
    %197 = vector.shape_cast %196 : vector<2x8xf32> to vector<2x8x1xf32>
    %198 = tpu.reciprocal %197 {approx = true} : vector<2x8x1xf32> -> vector<2x8x1xf32>
    %199 = vector.broadcast %198 : vector<2x8x1xf32> to vector<2x8x8xf32>
    %200 = arith.mulf %195, %199 : vector<2x8x8xf32>
    "tpu.trace_start"() <{level = 10 : i32, message = "bqk,bkd->bqd"}> : () -> ()
    %cst_86 = arith.constant dense<0.000000e+00> : vector<2x8x16xf32>
    %201 = tpu.matmul %200, %185, %cst_86 {dimension_numbers = #tpu.dot_dimension_numbers<[2], [1], [1], [2], [0, 0, 0, 1, 1, 2], [0], [0]>} : vector<2x8x8xf32>, vector<2x8x16xf32>, vector<2x8x16xf32> -> vector<2x8x16xf32>
    "tpu.trace_stop"() : () -> ()
    %202 = vector.shape_cast %201 : vector<2x8x16xf32> to vector<16x16xf32>
    %203 = vector.extract_strided_slice %179 {offsets = [0, 16], sizes = [16, 16], strides = [1, 1]} : vector<16x96xf32> to vector<16x16xf32>
    %204 = vector.shape_cast %203 : vector<16x16xf32> to vector<2x8x16xf32>
    %205 = vector.extract_strided_slice %179 {offsets = [0, 48], sizes = [16, 16], strides = [1, 1]} : vector<16x96xf32> to vector<16x16xf32>
    %206 = vector.shape_cast %205 : vector<16x16xf32> to vector<2x8x16xf32>
    %207 = vector.extract_strided_slice %179 {offsets = [0, 80], sizes = [16, 16], strides = [1, 1]} : vector<16x96xf32> to vector<16x16xf32>
    %208 = vector.shape_cast %207 : vector<16x16xf32> to vector<2x8x16xf32>
    "tpu.trace_start"() <{level = 10 : i32, message = "bqd,bkd->bqk"}> : () -> ()
    %cst_87 = arith.constant dense<0.000000e+00> : vector<2x8x8xf32>
    %209 = tpu.matmul %204, %206, %cst_87 {dimension_numbers = #tpu.dot_dimension_numbers<[2], [2], [1], [1], [0, 0, 0, 1, 1, 1], [0], [0]>} : vector<2x8x16xf32>, vector<2x8x16xf32>, vector<2x8x8xf32> -> vector<2x8x8xf32>
    "tpu.trace_stop"() : () -> ()
    %cst_88 = arith.constant 2.500000e-01 : f32
    %210 = vector.broadcast %cst_88 : f32 to vector<2x8x8xf32>
    %211 = arith.mulf %209, %210 : vector<2x8x8xf32>
    %212 = vector.broadcast %25 : vector<2x1x8xf32> to vector<2x8x8xf32>
    %213 = arith.addf %211, %212 : vector<2x8x8xf32>
    %cst_89 = arith.constant dense<0xFF800000> : vector<2x8xf32>
    %214 = vector.multi_reduction <maximumf>, %213, %cst_89 [2] : vector<2x8x8xf32> to vector<2x8xf32>
    %215 = vector.shape_cast %214 : vector<2x8xf32> to vector<2x8x1xf32>
    %216 = vector.broadcast %215 : vector<2x8x1xf32> to vector<2x8x8xf32>
    %217 = arith.subf %213, %216 : vector<2x8x8xf32>
    %218 = math.exp %217 : vector<2x8x8xf32>
    %cst_90 = arith.constant dense<0.000000e+00> : vector<2x8xf32>
    %219 = vector.multi_reduction <add>, %218, %cst_90 [2] : vector<2x8x8xf32> to vector<2x8xf32>
    %220 = vector.shape_cast %219 : vector<2x8xf32> to vector<2x8x1xf32>
    %221 = tpu.reciprocal %220 {approx = true} : vector<2x8x1xf32> -> vector<2x8x1xf32>
    %222 = vector.broadcast %221 : vector<2x8x1xf32> to vector<2x8x8xf32>
    %223 = arith.mulf %218, %222 : vector<2x8x8xf32>
    "tpu.trace_start"() <{level = 10 : i32, message = "bqk,bkd->bqd"}> : () -> ()
    %cst_91 = arith.constant dense<0.000000e+00> : vector<2x8x16xf32>
    %224 = tpu.matmul %223, %208, %cst_91 {dimension_numbers = #tpu.dot_dimension_numbers<[2], [1], [1], [2], [0, 0, 0, 1, 1, 2], [0], [0]>} : vector<2x8x8xf32>, vector<2x8x16xf32>, vector<2x8x16xf32> -> vector<2x8x16xf32>
    "tpu.trace_stop"() : () -> ()
    %225 = vector.shape_cast %224 : vector<2x8x16xf32> to vector<16x16xf32>
    %226 = tpu.concatenate %202, %225 in 1 : vector<16x16xf32>, vector<16x16xf32> -> vector<16x32xf32>
    %c1_92 = arith.constant 1 : index
    %c0_93 = arith.constant 0 : index
    %c0_94 = arith.constant 0 : index
    %227 = vector.load %arg6[%c1_92, %c0_93, %c0_94] : memref<2x32x32xbf16, #tpu.memory_space<vmem>>, vector<1x32x32xbf16>
    %228 = vector.shape_cast %227 : vector<1x32x32xbf16> to vector<32x32xbf16>
    %229 = arith.truncf %226 : vector<16x32xf32> to vector<16x32xbf16>
    %cst_95 = arith.constant dense<0.000000e+00> : vector<16x32xf32>
    %230 = tpu.matmul %229, %228, %cst_95 {dimension_numbers = #tpu.dot_dimension_numbers<[1], [0], [0], [1], [0, 0, 1, 1], [], []>} : vector<16x32xbf16>, vector<32x32xbf16>, vector<16x32xf32> -> vector<16x32xf32>
    %c1_96 = arith.constant 1 : index
    %c0_97 = arith.constant 0 : index
    %c0_98 = arith.constant 0 : index
    %231 = vector.load %arg7[%c1_96, %c0_97, %c0_98] : memref<2x1x32xf32, #tpu.memory_space<vmem>>, vector<1x1x32xf32>
    %232 = vector.shape_cast %231 : vector<1x1x32xf32> to vector<1x32xf32>
    %233 = vector.broadcast %232 : vector<1x32xf32> to vector<16x32xf32>
    %234 = arith.addf %230, %233 : vector<16x32xf32>
    %235 = arith.addf %234, %171 : vector<16x32xf32>
    %c1_99 = arith.constant 1 : index
    %c0_100 = arith.constant 0 : index
    %c0_101 = arith.constant 0 : index
    %236 = vector.load %arg8[%c1_99, %c0_100, %c0_101] : memref<2x1x32xf32, #tpu.memory_space<vmem>>, vector<1x1x32xf32>
    %237 = vector.shape_cast %236 : vector<1x1x32xf32> to vector<1x32xf32>
    %c1_102 = arith.constant 1 : index
    %c0_103 = arith.constant 0 : index
    %c0_104 = arith.constant 0 : index
    %238 = vector.load %arg9[%c1_102, %c0_103, %c0_104] : memref<2x1x32xf32, #tpu.memory_space<vmem>>, vector<1x1x32xf32>
    %239 = vector.shape_cast %238 : vector<1x1x32xf32> to vector<1x32xf32>
    %cst_105 = arith.constant dense<0.000000e+00> : vector<16xf32>
    %240 = vector.multi_reduction <add>, %235, %cst_105 [1] : vector<16x32xf32> to vector<16xf32>
    %241 = vector.shape_cast %240 : vector<16xf32> to vector<16x1xf32>
    %cst_106 = arith.constant 3.200000e+01 : f32
    %242 = vector.broadcast %cst_106 : f32 to vector<16x1xf32>
    %243 = arith.divf %241, %242 : vector<16x1xf32>
    %244 = vector.broadcast %243 : vector<16x1xf32> to vector<16x32xf32>
    %245 = arith.subf %235, %244 : vector<16x32xf32>
    %246 = arith.mulf %245, %245 : vector<16x32xf32>
    %cst_107 = arith.constant dense<0.000000e+00> : vector<16xf32>
    %247 = vector.multi_reduction <add>, %246, %cst_107 [1] : vector<16x32xf32> to vector<16xf32>
    %248 = vector.shape_cast %247 : vector<16xf32> to vector<16x1xf32>
    %cst_108 = arith.constant 3.200000e+01 : f32
    %249 = vector.broadcast %cst_108 : f32 to vector<16x1xf32>
    %250 = arith.divf %248, %249 : vector<16x1xf32>
    %251 = vector.broadcast %243 : vector<16x1xf32> to vector<16x32xf32>
    %252 = arith.subf %235, %251 : vector<16x32xf32>
    %cst_109 = arith.constant 9.99999996E-13 : f32
    %253 = vector.broadcast %cst_109 : f32 to vector<16x1xf32>
    %254 = arith.addf %250, %253 : vector<16x1xf32>
    %255 = math.rsqrt %254 : vector<16x1xf32>
    %256 = vector.broadcast %255 : vector<16x1xf32> to vector<16x32xf32>
    %257 = arith.mulf %252, %256 : vector<16x32xf32>
    %258 = vector.broadcast %237 : vector<1x32xf32> to vector<16x32xf32>
    %259 = arith.mulf %257, %258 : vector<16x32xf32>
    %260 = vector.broadcast %239 : vector<1x32xf32> to vector<16x32xf32>
    %261 = arith.addf %259, %260 : vector<16x32xf32>
    %c1_110 = arith.constant 1 : index
    %c0_111 = arith.constant 0 : index
    %c0_112 = arith.constant 0 : index
    %262 = vector.load %arg10[%c1_110, %c0_111, %c0_112] : memref<2x32x64xbf16, #tpu.memory_space<vmem>>, vector<1x32x64xbf16>
    %263 = vector.shape_cast %262 : vector<1x32x64xbf16> to vector<32x64xbf16>
    %264 = arith.truncf %261 : vector<16x32xf32> to vector<16x32xbf16>
    %cst_113 = arith.constant dense<0.000000e+00> : vector<16x64xf32>
    %265 = tpu.matmul %264, %263, %cst_113 {dimension_numbers = #tpu.dot_dimension_numbers<[1], [0], [0], [1], [0, 0, 1, 1], [], []>} : vector<16x32xbf16>, vector<32x64xbf16>, vector<16x64xf32> -> vector<16x64xf32>
    %c1_114 = arith.constant 1 : index
    %c0_115 = arith.constant 0 : index
    %c0_116 = arith.constant 0 : index
    %266 = vector.load %arg11[%c1_114, %c0_115, %c0_116] : memref<2x1x64xf32, #tpu.memory_space<vmem>>, vector<1x1x64xf32>
    %267 = vector.shape_cast %266 : vector<1x1x64xf32> to vector<1x64xf32>
    %268 = vector.broadcast %267 : vector<1x64xf32> to vector<16x64xf32>
    %269 = arith.addf %265, %268 : vector<16x64xf32>
    %270 = arith.mulf %269, %269 : vector<16x64xf32>
    %271 = arith.mulf %269, %270 : vector<16x64xf32>
    %cst_117 = arith.constant 4.471500e-02 : f32
    %272 = vector.broadcast %cst_117 : f32 to vector<16x64xf32>
    %273 = arith.mulf %272, %271 : vector<16x64xf32>
    %274 = arith.addf %269, %273 : vector<16x64xf32>
    %cst_118 = arith.constant 0.797884583 : f32
    %275 = vector.broadcast %cst_118 : f32 to vector<16x64xf32>
    %276 = arith.mulf %275, %274 : vector<16x64xf32>
    %277 = math.tanh %276 : vector<16x64xf32>
    %cst_119 = arith.constant 1.000000e+00 : f32
    %278 = vector.broadcast %cst_119 : f32 to vector<16x64xf32>
    %279 = arith.addf %278, %277 : vector<16x64xf32>
    %cst_120 = arith.constant 5.000000e-01 : f32
    %280 = vector.broadcast %cst_120 : f32 to vector<16x64xf32>
    %281 = arith.mulf %280, %279 : vector<16x64xf32>
    %282 = arith.mulf %269, %281 : vector<16x64xf32>
    %c1_121 = arith.constant 1 : index
    %c0_122 = arith.constant 0 : index
    %c0_123 = arith.constant 0 : index
    %283 = vector.load %arg12[%c1_121, %c0_122, %c0_123] : memref<2x64x32xbf16, #tpu.memory_space<vmem>>, vector<1x64x32xbf16>
    %284 = vector.shape_cast %283 : vector<1x64x32xbf16> to vector<64x32xbf16>
    %285 = arith.truncf %282 : vector<16x64xf32> to vector<16x64xbf16>
    %cst_124 = arith.constant dense<0.000000e+00> : vector<16x32xf32>
    %286 = tpu.matmul %285, %284, %cst_124 {dimension_numbers = #tpu.dot_dimension_numbers<[1], [0], [0], [1], [0, 0, 1, 1], [], []>} : vector<16x64xbf16>, vector<64x32xbf16>, vector<16x32xf32> -> vector<16x32xf32>
    %c1_125 = arith.constant 1 : index
    %c0_126 = arith.constant 0 : index
    %c0_127 = arith.constant 0 : index
    %287 = vector.load %arg13[%c1_125, %c0_126, %c0_127] : memref<2x1x32xf32, #tpu.memory_space<vmem>>, vector<1x1x32xf32>
    %288 = vector.shape_cast %287 : vector<1x1x32xf32> to vector<1x32xf32>
    %289 = vector.broadcast %288 : vector<1x32xf32> to vector<16x32xf32>
    %290 = arith.addf %286, %289 : vector<16x32xf32>
    %291 = arith.addf %290, %261 : vector<16x32xf32>
    %c1_128 = arith.constant 1 : index
    %c0_129 = arith.constant 0 : index
    %c0_130 = arith.constant 0 : index
    %292 = vector.load %arg14[%c1_128, %c0_129, %c0_130] : memref<2x1x32xf32, #tpu.memory_space<vmem>>, vector<1x1x32xf32>
    %293 = vector.shape_cast %292 : vector<1x1x32xf32> to vector<1x32xf32>
    %c1_131 = arith.constant 1 : index
    %c0_132 = arith.constant 0 : index
    %c0_133 = arith.constant 0 : index
    %294 = vector.load %arg15[%c1_131, %c0_132, %c0_133] : memref<2x1x32xf32, #tpu.memory_space<vmem>>, vector<1x1x32xf32>
    %295 = vector.shape_cast %294 : vector<1x1x32xf32> to vector<1x32xf32>
    %cst_134 = arith.constant dense<0.000000e+00> : vector<16xf32>
    %296 = vector.multi_reduction <add>, %291, %cst_134 [1] : vector<16x32xf32> to vector<16xf32>
    %297 = vector.shape_cast %296 : vector<16xf32> to vector<16x1xf32>
    %cst_135 = arith.constant 3.200000e+01 : f32
    %298 = vector.broadcast %cst_135 : f32 to vector<16x1xf32>
    %299 = arith.divf %297, %298 : vector<16x1xf32>
    %300 = vector.broadcast %299 : vector<16x1xf32> to vector<16x32xf32>
    %301 = arith.subf %291, %300 : vector<16x32xf32>
    %302 = arith.mulf %301, %301 : vector<16x32xf32>
    %cst_136 = arith.constant dense<0.000000e+00> : vector<16xf32>
    %303 = vector.multi_reduction <add>, %302, %cst_136 [1] : vector<16x32xf32> to vector<16xf32>
    %304 = vector.shape_cast %303 : vector<16xf32> to vector<16x1xf32>
    %cst_137 = arith.constant 3.200000e+01 : f32
    %305 = vector.broadcast %cst_137 : f32 to vector<16x1xf32>
    %306 = arith.divf %304, %305 : vector<16x1xf32>
    %307 = vector.broadcast %299 : vector<16x1xf32> to vector<16x32xf32>
    %308 = arith.subf %291, %307 : vector<16x32xf32>
    %cst_138 = arith.constant 9.99999996E-13 : f32
    %309 = vector.broadcast %cst_138 : f32 to vector<16x1xf32>
    %310 = arith.addf %306, %309 : vector<16x1xf32>
    %311 = math.rsqrt %310 : vector<16x1xf32>
    %312 = vector.broadcast %311 : vector<16x1xf32> to vector<16x32xf32>
    %313 = arith.mulf %308, %312 : vector<16x32xf32>
    %314 = vector.broadcast %293 : vector<1x32xf32> to vector<16x32xf32>
    %315 = arith.mulf %313, %314 : vector<16x32xf32>
    %316 = vector.broadcast %295 : vector<1x32xf32> to vector<16x32xf32>
    %317 = arith.addf %315, %316 : vector<16x32xf32>
    %318 = vector.shape_cast %317 : vector<16x32xf32> to vector<2x8x32xf32>
    %319 = vector.extract_strided_slice %318 {offsets = [0, 0, 0], sizes = [2, 1, 32], strides = [1, 1, 1]} : vector<2x8x32xf32> to vector<2x1x32xf32>
    %320 = vector.shape_cast %319 : vector<2x1x32xf32> to vector<2x32xf32>
    %c0_139 = arith.constant 0 : index
    %c0_140 = arith.constant 0 : index
    %321 = vector.load %arg16[%c0_139, %c0_140] : memref<32x32xbf16, #tpu.memory_space<vmem>>, vector<32x32xbf16>
    %322 = arith.truncf %320 : vector<2x32xf32> to vector<2x32xbf16>
    %cst_141 = arith.constant dense<0.000000e+00> : vector<2x32xf32>
    %323 = tpu.matmul %322, %321, %cst_141 {dimension_numbers = #tpu.dot_dimension_numbers<[1], [0], [0], [1], [0, 0, 1, 1], [], []>} : vector<2x32xbf16>, vector<32x32xbf16>, vector<2x32xf32> -> vector<2x32xf32>
    %c0_142 = arith.constant 0 : index
    %c0_143 = arith.constant 0 : index
    %324 = vector.load %arg17[%c0_142, %c0_143] : memref<1x32xf32, #tpu.memory_space<vmem>>, vector<1x32xf32>
    %325 = vector.broadcast %324 : vector<1x32xf32> to vector<2x32xf32>
    %326 = arith.addf %323, %325 : vector<2x32xf32>
    %327 = math.tanh %326 : vector<2x32xf32>
    %c0_144 = arith.constant 0 : index
    %c0_145 = arith.constant 0 : index
    %328 = vector.load %arg18[%c0_144, %c0_145] : memref<2x32xf32, #tpu.memory_space<vmem>>, vector<2x32xf32>
    tpu.vector_store %arg18[%c0_144, %c0_145], %327 {strides = array<i32>} : memref<2x32xf32, #tpu.memory_space<vmem>>, vector<2x32xf32>,
    return
  }
}

</mosaic_0001>

<llo_original>
// kernel: text_encoder_forward.1
$region0: #{text_encoder_forward.1}
  #allocation0 [shape = 'u32[]', space=smem, size = 0x4, offset = 0x4, fixed_abs, tag = 'smem constant byte address 0x4 - core index']
  #allocation1 [shape = 'u32[144,128]{1,0:T(1,128)}', space=vmem, size = 0x12000, scoped, tag = 'internal scratch']
  %s0 = inlined_call_operand.vmem [shape: f32[16,32], index: 0, kind: input, shape index: {}]
  %s1 = inlined_call_operand.vmem [shape: f32[2,1,8], index: 1, kind: input, shape index: {}]
  %s2 = inlined_call_operand.vmem [shape: f32[1,32], index: 2, kind: input, shape index: {}]
  %s3 = inlined_call_operand.vmem [shape: f32[1,32], index: 3, kind: input, shape index: {}]
  %s4 = inlined_call_operand.vmem [shape: bf16[2,32,96], index: 4, kind: input, shape index: {}]
  %s5 = inlined_call_operand.vmem [shape: f32[2,1,96], index: 5, kind: input, shape index: {}]
  %s6 = inlined_call_operand.vmem [shape: bf16[2,32,32], index: 6, kind: input, shape index: {}]
  %s7 = inlined_call_operand.vmem [shape: f32[2,1,32], index: 7, kind: input, shape index: {}]
  %s8 = inlined_call_operand.vmem [shape: f32[2,1,32], index: 8, kind: input, shape index: {}]
  %s9 = inlined_call_operand.vmem [shape: f32[2,1,32], index: 9, kind: input, shape index: {}]
  %s10 = inlined_call_operand.vmem [shape: bf16[2,32,64], index: 10, kind: input, shape index: {}]
  %s11 = inlined_call_operand.vmem [shape: f32[2,1,64], index: 11, kind: input, shape index: {}]
  %s12 = inlined_call_operand.vmem [shape: bf16[2,64,32], index: 12, kind: input, shape index: {}]
  %s13 = inlined_call_operand.vmem [shape: f32[2,1,32], index: 13, kind: input, shape index: {}]
  %s14 = inlined_call_operand.vmem [shape: f32[2,1,32], index: 14, kind: input, shape index: {}]
  %s15 = inlined_call_operand.vmem [shape: f32[2,1,32], index: 15, kind: input, shape index: {}]
  %s16 = inlined_call_operand.vmem [shape: bf16[32,32], index: 16, kind: input, shape index: {}]
  %s17 = inlined_call_operand.vmem [shape: f32[1,32], index: 17, kind: input, shape index: {}]
  %s18 = inlined_call_operand.hbm [shape: f32[2,32], index: 18, kind: output, shape index: {}]
  %s19 = sld [smem:[#allocation0]]
  $region82: #{text_encoder_forward.1} parent=0
    _
  %s21 = ssub.s32 1, %s19
  %s22 = scalar_select 0, %s21, %s19
  $region1: #{text_encoder_forward.1} parent=0
    #allocation2 [shape = 'u8[1024]{0}', space=vmem, size = 0x400, scoped, tag = 'output window, operand 0, single buffered']
    #allocation3 [shape = 's32[1]{0}', space=sflag, size = 0x4, scoped, tag = 'scoped memory for text_encoder_forward.1']
    %23 = vsyncpa [#allocation3], 0
    // Predicated region
    $region2: #{text_encoder_forward.1} parent=1 // pred_check
      _
    $region3: #{text_encoder_forward.1} parent=1 // pred_check_branch
      %25 = sbr.rel (0) target = $region5
    $region4: #{text_encoder_forward.1} parent=1 // pred_region
      _
    $region5: #{text_encoder_forward.1} parent=1 // pred_fallthru
      _
    // Predicated region
    $region6: #{text_encoder_forward.1} parent=1 // pred_check
      _
    $region7: #{text_encoder_forward.1} parent=1 // pred_check_branch
      %27 = sbr.rel (0) target = $region9
    $region8: #{text_encoder_forward.1} parent=1 // pred_region
      _
    $region9: #{text_encoder_forward.1} parent=1 // pred_fallthru
      _
    // Predicated region
    $region10: #{text_encoder_forward.1} parent=1 // pred_check
      _
    $region11: #{text_encoder_forward.1} parent=1 // pred_check_branch
      %29 = sbr.rel (0) target = $region13
    $region12: #{text_encoder_forward.1} parent=1 // pred_region
      _
    $region13: #{text_encoder_forward.1} parent=1 // pred_fallthru
      _
    // Predicated region
    $region14: #{text_encoder_forward.1} parent=1 // pred_check
      _
    $region15: #{text_encoder_forward.1} parent=1 // pred_check_branch
      %31 = sbr.rel (0) target = $region17
    $region16: #{text_encoder_forward.1} parent=1 // pred_region
      _
    $region17: #{text_encoder_forward.1} parent=1 // pred_fallthru
      _
    // Predicated region
    $region18: #{text_encoder_forward.1} parent=1 // pred_check
      _
    $region19: #{text_encoder_forward.1} parent=1 // pred_check_branch
      %33 = sbr.rel (0) target = $region21
    $region20: #{text_encoder_forward.1} parent=1 // pred_region
      _
    $region21: #{text_encoder_forward.1} parent=1 // pred_fallthru
      _
    // Predicated region
    $region22: #{text_encoder_forward.1} parent=1 // pred_check
      _
    $region23: #{text_encoder_forward.1} parent=1 // pred_check_branch
      %35 = sbr.rel (0) target = $region25
    $region24: #{text_encoder_forward.1} parent=1 // pred_region
      _
    $region25: #{text_encoder_forward.1} parent=1 // pred_fallthru
      _
    // Predicated region
    $region26: #{text_encoder_forward.1} parent=1 // pred_check
      _
    $region27: #{text_encoder_forward.1} parent=1 // pred_check_branch
      %37 = sbr.rel (0) target = $region29
    $region28: #{text_encoder_forward.1} parent=1 // pred_region
      _
    $region29: #{text_encoder_forward.1} parent=1 // pred_fallthru
      _
    // Predicated region
    $region30: #{text_encoder_forward.1} parent=1 // pred_check
      _
    $region31: #{text_encoder_forward.1} parent=1 // pred_check_branch
      %39 = sbr.rel (0) target = $region33
    $region32: #{text_encoder_forward.1} parent=1 // pred_region
      _
    $region33: #{text_encoder_forward.1} parent=1 // pred_fallthru
      _
    // Predicated region
    $region34: #{text_encoder_forward.1} parent=1 // pred_check
      _
    $region35: #{text_encoder_forward.1} parent=1 // pred_check_branch
      %41 = sbr.rel (0) target = $region37
    $region36: #{text_encoder_forward.1} parent=1 // pred_region
      _
    $region37: #{text_encoder_forward.1} parent=1 // pred_fallthru
      _
    // Predicated region
    $region38: #{text_encoder_forward.1} parent=1 // pred_check
      _
    $region39: #{text_encoder_forward.1} parent=1 // pred_check_branch
      %43 = sbr.rel (0) target = $region41
    $region40: #{text_encoder_forward.1} parent=1 // pred_region
      _
    $region41: #{text_encoder_forward.1} parent=1 // pred_fallthru
      _
    // Predicated region
    $region42: #{text_encoder_forward.1} parent=1 // pred_check
      _
    $region43: #{text_encoder_forward.1} parent=1 // pred_check_branch
      %45 = sbr.rel (0) target = $region45
    $region44: #{text_encoder_forward.1} parent=1 // pred_region
      _
    $region45: #{text_encoder_forward.1} parent=1 // pred_fallthru
      _
    // Predicated region
    $region46: #{text_encoder_forward.1} parent=1 // pred_check
      _
    $region47: #{text_encoder_forward.1} parent=1 // pred_check_branch
      %47 = sbr.rel (0) target = $region49
    $region48: #{text_encoder_forward.1} parent=1 // pred_region
      _
    $region49: #{text_encoder_forward.1} parent=1 // pred_fallthru
      _
    // Predicated region
    $region50: #{text_encoder_forward.1} parent=1 // pred_check
      _
    $region51: #{text_encoder_forward.1} parent=1 // pred_check_branch
      %49 = sbr.rel (0) target = $region53
    $region52: #{text_encoder_forward.1} parent=1 // pred_region
      _
    $region53: #{text_encoder_forward.1} parent=1 // pred_fallthru
      _
    // Predicated region
    $region54: #{text_encoder_forward.1} parent=1 // pred_check
      _
    $region55: #{text_encoder_forward.1} parent=1 // pred_check_branch
      %51 = sbr.rel (0) target = $region57
    $region56: #{text_encoder_forward.1} parent=1 // pred_region
      _
    $region57: #{text_encoder_forward.1} parent=1 // pred_fallthru
      _
    // Predicated region
    $region58: #{text_encoder_forward.1} parent=1 // pred_check
      _
    $region59: #{text_encoder_forward.1} parent=1 // pred_check_branch
      %53 = sbr.rel (0) target = $region61
    $region60: #{text_encoder_forward.1} parent=1 // pred_region
      _
    $region61: #{text_encoder_forward.1} parent=1 // pred_fallthru
      _
    // Predicated region
    $region62: #{text_encoder_forward.1} parent=1 // pred_check
      _
    $region63: #{text_encoder_forward.1} parent=1 // pred_check_branch
      %55 = sbr.rel (0) target = $region65
    $region64: #{text_encoder_forward.1} parent=1 // pred_region
      _
    $region65: #{text_encoder_forward.1} parent=1 // pred_fallthru
      _
    // Predicated region
    $region66: #{text_encoder_forward.1} parent=1 // pred_check
      _
    $region67: #{text_encoder_forward.1} parent=1 // pred_check_branch
      %57 = sbr.rel (0) target = $region69
    $region68: #{text_encoder_forward.1} parent=1 // pred_region
      _
    $region69: #{text_encoder_forward.1} parent=1 // pred_fallthru
      _
    // Predicated region
    $region70: #{text_encoder_forward.1} parent=1 // pred_check
      _
    $region71: #{text_encoder_forward.1} parent=1 // pred_check_branch
      %59 = sbr.rel (0) target = $region73
    $region72: #{text_encoder_forward.1} parent=1 // pred_region
      _
    $region73: #{text_encoder_forward.1} parent=1 // pred_fallthru
      _
    %v61 = vld [vmem:[%s0] sm:$0xff]
    %v62 = vld [vmem:[%s0 + $0x8] sm:$0xff]
    %v63 = vld [vmem:[%s2] sm:$0x1]
    %v64 = vld [vmem:[%s3] sm:$0x1]
    %vm65 = vcmask 261120
    %v66 = vsel %vm65, %v61, 0.0
    %67 = vadd.xlane.f32.xlu0 %v66
    %v68 = vpop.xlane.xlu0 %67
    %v69 = vsel %vm65, %v62, 0.0
    %70 = vadd.xlane.f32.xlu0 %v69
    %v71 = vpop.xlane.xlu0 %70
    %v72 = vrcp.pop 32.0
    %v73 = vmul.f32 %v68, %v72
    %v74 = vmul.f32 %v71, %v72
    %v75 = vsub.f32 %v61, %v73
    %v76 = vsub.f32 %v62, %v74
    %v77 = vmul.f32 %v75, %v75
    %v78 = vmul.f32 %v76, %v76
    %v79 = vsel %vm65, %v77, 0.0
    %80 = vadd.xlane.f32.xlu0 %v79
    %v81 = vpop.xlane.xlu0 %80
    %v82 = vsel %vm65, %v78, 0.0
    %83 = vadd.xlane.f32.xlu0 %v82
    %v84 = vpop.xlane.xlu0 %83
    %v85 = vmul.f32 %v81, %v72
    %v86 = vmul.f32 %v84, %v72
    %v87 = vadd.f32 %v85, 1e-12
    %v88 = vadd.f32 %v86, 1e-12
    %v89 = vrsqrt.pop %v87
    %v90 = vrsqrt.pop %v88
    %v91 = vmul.f32 %v75, %v89
    %v92 = vmul.f32 %v76, %v90
    %v94 = vlaneseq
    %v95 = vshrl.u32 %v94, 7
    %v96 = vsub.s32 0, %v95
    %v97 = vrot.slane %v63, %v96
    %v99 = vmul.f32 %v91, %v97
    %v100 = vmul.f32 %v92, %v97
    %v102 = vlaneseq
    %v103 = vshrl.u32 %v102, 7
    %v104 = vsub.s32 0, %v103
    %v105 = vrot.slane %v64, %v104
    %v107 = vadd.f32 %v99, %v105
    %v108 = vadd.f32 %v100, %v105
    %v109 = vld [vmem:[%s1] sm:$0x1]
    %v110 = vld [vmem:[%s1 + $0x1] sm:$0x1]
    %v111 = vld [vmem:[%s4] sm:$0xf]
    %v112 = vld [vmem:[%s4 + $0x4] sm:$0xf]
    %v113 = vld [vmem:[%s4 + $0x8] sm:$0xf]
    %v114 = vld [vmem:[%s4 + $0xc] sm:$0xf]
    %v115 = vpack.c.bf16 %v108, %v107
    %v116 = vld [vmem:[%s5] sm:$0x1]
    %v118 = vlaneseq
    %v119 = vshrl.u32 %v118, 7
    %v120 = vsub.s32 0, %v119
    %v121 = vrot.slane %v116, %v120
    %v127 = vunpack.c.l.b16 %v111
    %v128 = vunpack.c.l.b16 %v112
    %v129 = vunpack.c.l.b16 %v113
    %v130 = vunpack.c.l.b16 %v114
    %v131 = vpack.c.b16 %v128, %v127
    %v132 = vpack.c.b16 %v130, %v129
    %v136 = vsel %vm65, %v115, 0
    %138 = vmatprep.subr.bf16.mxu0 0
    %139 = vmatpush1.bf16.msra.mxu0 %v131
    %140 = vmatprep.subr.bf16.mxu0 0
    %141 = vmatpush1.bf16.msra.mxu0 %v132
    %142 = vmatprep.subr.bf16.mxu0 0
    %143 = vmatpush1.bf16.msra.mxu0 0
    %144 = vmatprep.subr.bf16.mxu0 0
    %145 = vmatpush1.bf16.msra.mxu0 0
    %146 = vmatprep.subr.bf16.mxu0 0
    %147 = vmatpush1.bf16.msra.mxu0 0
    %148 = vmatprep.subr.bf16.mxu0 0
    %149 = vmatpush1.bf16.msra.mxu0 0
    %150 = vmatprep.subr.bf16.mxu0 0
    %151 = vmatpush1.bf16.msra.mxu0 0
    %152 = vmatprep.subr.bf16.mxu0 0
    %153 = vmatpush1.bf16.msra.mxu0 0
    %154 = vmatprep.subr.bf16.mxu0 0
    %155 = vmatpush1.bf16.msra.mxu0 0
    %156 = vmatprep.subr.bf16.mxu0 0
    %157 = vmatpush1.bf16.msra.mxu0 0
    %158 = vmatprep.subr.bf16.mxu0 0
    %159 = vmatpush1.bf16.msra.mxu0 0
    %160 = vmatprep.subr.bf16.mxu0 0
    %161 = vmatpush1.bf16.msra.mxu0 0
    %162 = vmatprep.subr.bf16.mxu0 0
    %163 = vmatpush1.bf16.msra.mxu0 0
    %164 = vmatprep.subr.bf16.mxu0 0
    %165 = vmatpush1.bf16.msra.mxu0 0
    %166 = vmatprep.subr.bf16.mxu0 0
    %167 = vmatpush1.bf16.msra.mxu0 0
    %168 = vmatprep.subr.bf16.mxu0 0
    %169 = vmatpush1.bf16.msra.mxu0 0
    %170 = vmatprep.mubr.bf16.mxu0 0
    %171 = vmatmul.mubr.bf16.gmra.mrb[0].mxu0 %v136
    %v172 = vpop.f32.mrb[0].mxu0
    %v173 = vadd.f32 %v121, %v172
    %v174 = vpop.f32.mrb[0].mxu0
    %v175 = vpop.f32.mrb[0].mxu0
    %v176 = vadd.f32 %v121, %v175
    %v177 = vpop.f32.mrb[0].mxu0
    %178 = vdwg.mxu0
    %180 = vrot.lane.b32.xlu0 %v173, 96
    %v181 = vpop.permute.xlu0 %180
    %vm182 = vcmask 130048
    %v183 = vsel %vm182, %v173, 0
    %v185 = vsel %vm182, %v181, 0
    %187 = vmatprep.subr.mxu0 0.0
    %188 = vmatpush1.xpose.msra.mxu0 %v185
    %189 = vmatprep.subr.mxu0 0.0
    %190 = vmatpush1.xpose.msra.mxu0 0.0
    %191 = vmatprep.subr.mxu0 0.0
    %192 = vmatpush1.xpose.msra.mxu0 0.0
    %193 = vmatprep.subr.mxu0 0.0
    %194 = vmatpush1.xpose.msra.mxu0 0.0
    %195 = vmatprep.subr.mxu0 0.0
    %196 = vmatpush1.xpose.msra.mxu0 0.0
    %197 = vmatprep.subr.mxu0 0.0
    %198 = vmatpush1.xpose.msra.mxu0 0.0
    %199 = vmatprep.subr.mxu0 0.0
    %200 = vmatpush1.xpose.msra.mxu0 0.0
    %201 = vmatprep.subr.mxu0 0.0
    %202 = vmatpush1.xpose.msra.mxu0 0.0
    %203 = vmatprep.subr.mxu0 0.0
    %204 = vmatpush1.xpose.msra.mxu0 0.0
    %205 = vmatprep.subr.mxu0 0.0
    %206 = vmatpush1.xpose.msra.mxu0 0.0
    %207 = vmatprep.subr.mxu0 0.0
    %208 = vmatpush1.xpose.msra.mxu0 0.0
    %209 = vmatprep.subr.mxu0 0.0
    %210 = vmatpush1.xpose.msra.mxu0 0.0
    %211 = vmatprep.subr.mxu0 0.0
    %212 = vmatpush1.xpose.msra.mxu0 0.0
    %213 = vmatprep.subr.mxu0 0.0
    %214 = vmatpush1.xpose.msra.mxu0 0.0
    %215 = vmatprep.subr.mxu0 0.0
    %216 = vmatpush1.xpose.msra.mxu0 0.0
    %217 = vmatprep.subr.mxu0 0.0
    %218 = vmatpush1.xpose.msra.mxu0 0.0
    %219 = vmatprep.subr.mxu0 0.0
    %220 = vmatpush1.xpose.msra.mxu0 0.0
    %221 = vmatprep.subr.mxu0 0.0
    %222 = vmatpush1.xpose.msra.mxu0 0.0
    %223 = vmatprep.subr.mxu0 0.0
    %224 = vmatpush1.xpose.msra.mxu0 0.0
    %225 = vmatprep.subr.mxu0 0.0
    %226 = vmatpush1.xpose.msra.mxu0 0.0
    %227 = vmatprep.subr.mxu0 0.0
    %228 = vmatpush1.xpose.msra.mxu0 0.0
    %229 = vmatprep.subr.mxu0 0.0
    %230 = vmatpush1.xpose.msra.mxu0 0.0
    %231 = vmatprep.subr.mxu0 0.0
    %232 = vmatpush1.xpose.msra.mxu0 0.0
    %233 = vmatprep.subr.mxu0 0.0
    %234 = vmatpush1.xpose.msra.mxu0 0.0
    %235 = vmatprep.subr.mxu0 0.0
    %236 = vmatpush1.xpose.msra.mxu0 0.0
    %237 = vmatprep.subr.mxu0 0.0
    %238 = vmatpush1.xpose.msra.mxu0 0.0
    %239 = vmatprep.subr.mxu0 0.0
    %240 = vmatpush1.xpose.msra.mxu0 0.0
    %241 = vmatprep.subr.mxu0 0.0
    %242 = vmatpush1.xpose.msra.mxu0 0.0
    %243 = vmatprep.subr.mxu0 0.0
    %244 = vmatpush1.xpose.msra.mxu0 0.0
    %245 = vmatprep.subr.mxu0 0.0
    %246 = vmatpush1.xpose.msra.mxu0 0.0
    %247 = vmatprep.subr.mxu0 0.0
    %248 = vmatpush1.xpose.msra.mxu0 0.0
    %249 = vmatprep.subr.mxu0 0.0
    %250 = vmatpush1.xpose.msra.mxu0 0.0
    %251 = vmatprep.mubr.f32.mxu0 0.0
    %252 = vmatmul.mubr.f32.gmra.mrb[0].mxu0 %v183
    %v253 = vpop.f32.mrb[0].mxu0
    %v254 = vadd.f32 0.0, %v253
    %v255 = vpop.f32.mrb[0].mxu0
    %256 = vdwg.mxu0
    %258 = vrot.lane.b32.xlu0 %v176, 96
    %v259 = vpop.permute.xlu0 %258
    %v260 = vsel %vm182, %v176, 0
    %v262 = vsel %vm182, %v259, 0
    %264 = vmatprep.subr.mxu0 0.0
    %265 = vmatpush1.xpose.msra.mxu0 %v262
    %266 = vmatprep.subr.mxu0 0.0
    %267 = vmatpush1.xpose.msra.mxu0 0.0
    %268 = vmatprep.subr.mxu0 0.0
    %269 = vmatpush1.xpose.msra.mxu0 0.0
    %270 = vmatprep.subr.mxu0 0.0
    %271 = vmatpush1.xpose.msra.mxu0 0.0
    %272 = vmatprep.subr.mxu0 0.0
    %273 = vmatpush1.xpose.msra.mxu0 0.0
    %274 = vmatprep.subr.mxu0 0.0
    %275 = vmatpush1.xpose.msra.mxu0 0.0
    %276 = vmatprep.subr.mxu0 0.0
    %277 = vmatpush1.xpose.msra.mxu0 0.0
    %278 = vmatprep.subr.mxu0 0.0
    %279 = vmatpush1.xpose.msra.mxu0 0.0
    %280 = vmatprep.subr.mxu0 0.0
    %281 = vmatpush1.xpose.msra.mxu0 0.0
    %282 = vmatprep.subr.mxu0 0.0
    %283 = vmatpush1.xpose.msra.mxu0 0.0
    %284 = vmatprep.subr.mxu0 0.0
    %285 = vmatpush1.xpose.msra.mxu0 0.0
    %286 = vmatprep.subr.mxu0 0.0
    %287 = vmatpush1.xpose.msra.mxu0 0.0
    %288 = vmatprep.subr.mxu0 0.0
    %289 = vmatpush1.xpose.msra.mxu0 0.0
    %290 = vmatprep.subr.mxu0 0.0
    %291 = vmatpush1.xpose.msra.mxu0 0.0
    %292 = vmatprep.subr.mxu0 0.0
    %293 = vmatpush1.xpose.msra.mxu0 0.0
    %294 = vmatprep.subr.mxu0 0.0
    %295 = vmatpush1.xpose.msra.mxu0 0.0
    %296 = vmatprep.subr.mxu0 0.0
    %297 = vmatpush1.xpose.msra.mxu0 0.0
    %298 = vmatprep.subr.mxu0 0.0
    %299 = vmatpush1.xpose.msra.mxu0 0.0
    %300 = vmatprep.subr.mxu0 0.0
    %301 = vmatpush1.xpose.msra.mxu0 0.0
    %302 = vmatprep.subr.mxu0 0.0
    %303 = vmatpush1.xpose.msra.mxu0 0.0
    %304 = vmatprep.subr.mxu0 0.0
    %305 = vmatpush1.xpose.msra.mxu0 0.0
    %306 = vmatprep.subr.mxu0 0.0
    %307 = vmatpush1.xpose.msra.mxu0 0.0
    %308 = vmatprep.subr.mxu0 0.0
    %309 = vmatpush1.xpose.msra.mxu0 0.0
    %310 = vmatprep.subr.mxu0 0.0
    %311 = vmatpush1.xpose.msra.mxu0 0.0
    %312 = vmatprep.subr.mxu0 0.0
    %313 = vmatpush1.xpose.msra.mxu0 0.0
    %314 = vmatprep.subr.mxu0 0.0
    %315 = vmatpush1.xpose.msra.mxu0 0.0
    %316 = vmatprep.subr.mxu0 0.0
    %317 = vmatpush1.xpose.msra.mxu0 0.0
    %318 = vmatprep.subr.mxu0 0.0
    %319 = vmatpush1.xpose.msra.mxu0 0.0
    %320 = vmatprep.subr.mxu0 0.0
    %321 = vmatpush1.xpose.msra.mxu0 0.0
    %322 = vmatprep.subr.mxu0 0.0
    %323 = vmatpush1.xpose.msra.mxu0 0.0
    %324 = vmatprep.subr.mxu0 0.0
    %325 = vmatpush1.xpose.msra.mxu0 0.0
    %326 = vmatprep.subr.mxu0 0.0
    %327 = vmatpush1.xpose.msra.mxu0 0.0
    %328 = vmatprep.mubr.f32.mxu0 0.0
    %329 = vmatmul.mubr.f32.gmra.mrb[0].mxu0 %v260
    %v330 = vpop.f32.mrb[0].mxu0
    %v331 = vadd.f32 0.0, %v330
    %v332 = vpop.f32.mrb[0].mxu0
    %333 = vdwg.mxu0
    %v334 = vmul.f32 %v254, 0.25
    %v335 = vmul.f32 %v331, 0.25
    %v338 = vlaneseq
    %v339 = vshrl.u32 %v338, 7
    %v340 = vsub.s32 0, %v339
    %v341 = vrot.slane %v109, %v340
    %v342 = vlaneseq
    %v343 = vshrl.u32 %v342, 7
    %v344 = vsub.s32 0, %v343
    %v345 = vrot.slane %v110, %v344
    %v348 = vadd.f32 %v334, %v341
    %v349 = vadd.f32 %v335, %v345
    %vm350 = vcmask 64512
    %v351 = vsel %vm350, %v348, -inf
    %352 = vmax.xlane.f32.xlu0 %v351
    %v353 = vpop.xlane.xlu0 %352
    %v354 = vsel %vm350, %v349, -inf
    %355 = vmax.xlane.f32.xlu0 %v354
    %v356 = vpop.xlane.xlu0 %355
    %v357 = vsub.f32 %v348, %v353
    %v358 = vsub.f32 %v349, %v356
    %v359 = vmul.f32 %v357, 1.442695
    %v360 = vpow.pop %v359
    %v361 = vmul.f32 %v358, 1.442695
    %v362 = vpow.pop %v361
    %v363 = vsel %vm350, %v360, 0.0
    %364 = vadd.xlane.f32.xlu0 %v363
    %v365 = vpop.xlane.xlu0 %364
    %v366 = vsel %vm350, %v362, 0.0
    %367 = vadd.xlane.f32.xlu0 %v366
    %v368 = vpop.xlane.xlu0 %367
    %v369 = vrcp.pop %v365
    %v370 = vrcp.pop %v368
    %v371 = vmul.f32 %v360, %v369
    %v372 = vmul.f32 %v362, %v370
    %373 = vrot.lane.b32.xlu0 %v173, 64
    %v374 = vpop.permute.xlu0 %373
    %v377 = vsel %vm350, %v371, 0
    %379 = vmatprep.subr.mxu0 0.0
    %380 = vmatpush1.msra.mxu0 %v374
    %381 = vmatprep.subr.mxu0 0.0
    %382 = vmatpush1.msra.mxu0 0.0
    %383 = vmatprep.subr.mxu0 0.0
    %384 = vmatpush1.msra.mxu0 0.0
    %385 = vmatprep.subr.mxu0 0.0
    %386 = vmatpush1.msra.mxu0 0.0
    %387 = vmatprep.subr.mxu0 0.0
    %388 = vmatpush1.msra.mxu0 0.0
    %389 = vmatprep.subr.mxu0 0.0
    %390 = vmatpush1.msra.mxu0 0.0
    %391 = vmatprep.subr.mxu0 0.0
    %392 = vmatpush1.msra.mxu0 0.0
    %393 = vmatprep.subr.mxu0 0.0
    %394 = vmatpush1.msra.mxu0 0.0
    %395 = vmatprep.subr.mxu0 0.0
    %396 = vmatpush1.msra.mxu0 0.0
    %397 = vmatprep.subr.mxu0 0.0
    %398 = vmatpush1.msra.mxu0 0.0
    %399 = vmatprep.subr.mxu0 0.0
    %400 = vmatpush1.msra.mxu0 0.0
    %401 = vmatprep.subr.mxu0 0.0
    %402 = vmatpush1.msra.mxu0 0.0
    %403 = vmatprep.subr.mxu0 0.0
    %404 = vmatpush1.msra.mxu0 0.0
    %405 = vmatprep.subr.mxu0 0.0
    %406 = vmatpush1.msra.mxu0 0.0
    %407 = vmatprep.subr.mxu0 0.0
    %408 = vmatpush1.msra.mxu0 0.0
    %409 = vmatprep.subr.mxu0 0.0
    %410 = vmatpush1.msra.mxu0 0.0
    %411 = vmatprep.subr.mxu0 0.0
    %412 = vmatpush1.msra.mxu0 0.0
    %413 = vmatprep.subr.mxu0 0.0
    %414 = vmatpush1.msra.mxu0 0.0
    %415 = vmatprep.subr.mxu0 0.0
    %416 = vmatpush1.msra.mxu0 0.0
    %417 = vmatprep.subr.mxu0 0.0
    %418 = vmatpush1.msra.mxu0 0.0
    %419 = vmatprep.subr.mxu0 0.0
    %420 = vmatpush1.msra.mxu0 0.0
    %421 = vmatprep.subr.mxu0 0.0
    %422 = vmatpush1.msra.mxu0 0.0
    %423 = vmatprep.subr.mxu0 0.0
    %424 = vmatpush1.msra.mxu0 0.0
    %425 = vmatprep.subr.mxu0 0.0
    %426 = vmatpush1.msra.mxu0 0.0
    %427 = vmatprep.subr.mxu0 0.0
    %428 = vmatpush1.msra.mxu0 0.0
    %429 = vmatprep.subr.mxu0 0.0
    %430 = vmatpush1.msra.mxu0 0.0
    %431 = vmatprep.subr.mxu0 0.0
    %432 = vmatpush1.msra.mxu0 0.0
    %433 = vmatprep.subr.mxu0 0.0
    %434 = vmatpush1.msra.mxu0 0.0
    %435 = vmatprep.subr.mxu0 0.0
    %436 = vmatpush1.msra.mxu0 0.0
    %437 = vmatprep.subr.mxu0 0.0
    %438 = vmatpush1.msra.mxu0 0.0
    %439 = vmatprep.subr.mxu0 0.0
    %440 = vmatpush1.msra.mxu0 0.0
    %441 = vmatprep.subr.mxu0 0.0
    %442 = vmatpush1.msra.mxu0 0.0
    %443 = vmatprep.mubr.f32.mxu0 0.0
    %444 = vmatmul.mubr.f32.gmra.mrb[0].mxu0 %v377
    %v445 = vpop.f32.mrb[0].mxu0
    %v446 = vadd.f32 0.0, %v445
    %v447 = vpop.f32.mrb[0].mxu0
    %448 = vdwg.mxu0
    %449 = vrot.lane.b32.xlu0 %v176, 64
    %v450 = vpop.permute.xlu0 %449
    %v453 = vsel %vm350, %v372, 0
    %455 = vmatprep.subr.mxu0 0.0
    %456 = vmatpush1.msra.mxu0 %v450
    %457 = vmatprep.subr.mxu0 0.0
    %458 = vmatpush1.msra.mxu0 0.0
    %459 = vmatprep.subr.mxu0 0.0
    %460 = vmatpush1.msra.mxu0 0.0
    %461 = vmatprep.subr.mxu0 0.0
    %462 = vmatpush1.msra.mxu0 0.0
    %463 = vmatprep.subr.mxu0 0.0
    %464 = vmatpush1.msra.mxu0 0.0
    %465 = vmatprep.subr.mxu0 0.0
    %466 = vmatpush1.msra.mxu0 0.0
    %467 = vmatprep.subr.mxu0 0.0
    %468 = vmatpush1.msra.mxu0 0.0
    %469 = vmatprep.subr.mxu0 0.0
    %470 = vmatpush1.msra.mxu0 0.0
    %471 = vmatprep.subr.mxu0 0.0
    %472 = vmatpush1.msra.mxu0 0.0
    %473 = vmatprep.subr.mxu0 0.0
    %474 = vmatpush1.msra.mxu0 0.0
    %475 = vmatprep.subr.mxu0 0.0
    %476 = vmatpush1.msra.mxu0 0.0
    %477 = vmatprep.subr.mxu0 0.0
    %478 = vmatpush1.msra.mxu0 0.0
    %479 = vmatprep.subr.mxu0 0.0
    %480 = vmatpush1.msra.mxu0 0.0
    %481 = vmatprep.subr.mxu0 0.0
    %482 = vmatpush1.msra.mxu0 0.0
    %483 = vmatprep.subr.mxu0 0.0
    %484 = vmatpush1.msra.mxu0 0.0
    %485 = vmatprep.subr.mxu0 0.0
    %486 = vmatpush1.msra.mxu0 0.0
    %487 = vmatprep.subr.mxu0 0.0
    %488 = vmatpush1.msra.mxu0 0.0
    %489 = vmatprep.subr.mxu0 0.0
    %490 = vmatpush1.msra.mxu0 0.0
    %491 = vmatprep.subr.mxu0 0.0
    %492 = vmatpush1.msra.mxu0 0.0
    %493 = vmatprep.subr.mxu0 0.0
    %494 = vmatpush1.msra.mxu0 0.0
    %495 = vmatprep.subr.mxu0 0.0
    %496 = vmatpush1.msra.mxu0 0.0
    %497 = vmatprep.subr.mxu0 0.0
    %498 = vmatpush1.msra.mxu0 0.0
    %499 = vmatprep.subr.mxu0 0.0
    %500 = vmatpush1.msra.mxu0 0.0
    %501 = vmatprep.subr.mxu0 0.0
    %502 = vmatpush1.msra.mxu0 0.0
    %503 = vmatprep.subr.mxu0 0.0
    %504 = vmatpush1.msra.mxu0 0.0
    %505 = vmatprep.subr.mxu0 0.0
    %506 = vmatpush1.msra.mxu0 0.0
    %507 = vmatprep.subr.mxu0 0.0
    %508 = vmatpush1.msra.mxu0 0.0
    %509 = vmatprep.subr.mxu0 0.0
    %510 = vmatpush1.msra.mxu0 0.0
    %511 = vmatprep.subr.mxu0 0.0
    %512 = vmatpush1.msra.mxu0 0.0
    %513 = vmatprep.subr.mxu0 0.0
    %514 = vmatpush1.msra.mxu0 0.0
    %515 = vmatprep.subr.mxu0 0.0
    %516 = vmatpush1.msra.mxu0 0.0
    %517 = vmatprep.subr.mxu0 0.0
    %518 = vmatpush1.msra.mxu0 0.0
    %519 = vmatprep.mubr.f32.mxu0 0.0
    %520 = vmatmul.mubr.f32.gmra.mrb[0].mxu0 %v453
    %v521 = vpop.f32.mrb[0].mxu0
    %v522 = vadd.f32 0.0, %v521
    %v523 = vpop.f32.mrb[0].mxu0
    %524 = vdwg.mxu0
    %525 = vrot.lane.b32.xlu0 %v173, 112
    %v526 = vpop.permute.xlu0 %525
    %527 = vrot.lane.b32.xlu0 %v173, 80
    %v528 = vpop.permute.xlu0 %527
    %v529 = vsel %vm182, %v526, 0
    %v531 = vsel %vm182, %v528, 0
    %533 = vmatprep.subr.mxu0 0.0
    %534 = vmatpush1.xpose.msra.mxu0 %v531
    %535 = vmatprep.subr.mxu0 0.0
    %536 = vmatpush1.xpose.msra.mxu0 0.0
    %537 = vmatprep.subr.mxu0 0.0
    %538 = vmatpush1.xpose.msra.mxu0 0.0
    %539 = vmatprep.subr.mxu0 0.0
    %540 = vmatpush1.xpose.msra.mxu0 0.0
    %541 = vmatprep.subr.mxu0 0.0
    %542 = vmatpush1.xpose.msra.mxu0 0.0
    %543 = vmatprep.subr.mxu0 0.0
    %544 = vmatpush1.xpose.msra.mxu0 0.0
    %545 = vmatprep.subr.mxu0 0.0
    %546 = vmatpush1.xpose.msra.mxu0 0.0
    %547 = vmatprep.subr.mxu0 0.0
    %548 = vmatpush1.xpose.msra.mxu0 0.0
    %549 = vmatprep.subr.mxu0 0.0
    %550 = vmatpush1.xpose.msra.mxu0 0.0
    %551 = vmatprep.subr.mxu0 0.0
    %552 = vmatpush1.xpose.msra.mxu0 0.0
    %553 = vmatprep.subr.mxu0 0.0
    %554 = vmatpush1.xpose.msra.mxu0 0.0
    %555 = vmatprep.subr.mxu0 0.0
    %556 = vmatpush1.xpose.msra.mxu0 0.0
    %557 = vmatprep.subr.mxu0 0.0
    %558 = vmatpush1.xpose.msra.mxu0 0.0
    %559 = vmatprep.subr.mxu0 0.0
    %560 = vmatpush1.xpose.msra.mxu0 0.0
    %561 = vmatprep.subr.mxu0 0.0
    %562 = vmatpush1.xpose.msra.mxu0 0.0
    %563 = vmatprep.subr.mxu0 0.0
    %564 = vmatpush1.xpose.msra.mxu0 0.0
    %565 = vmatprep.subr.mxu0 0.0
    %566 = vmatpush1.xpose.msra.mxu0 0.0
    %567 = vmatprep.subr.mxu0 0.0
    %568 = vmatpush1.xpose.msra.mxu0 0.0
    %569 = vmatprep.subr.mxu0 0.0
    %570 = vmatpush1.xpose.msra.mxu0 0.0
    %571 = vmatprep.subr.mxu0 0.0
    %572 = vmatpush1.xpose.msra.mxu0 0.0
    %573 = vmatprep.subr.mxu0 0.0
    %574 = vmatpush1.xpose.msra.mxu0 0.0
    %575 = vmatprep.subr.mxu0 0.0
    %576 = vmatpush1.xpose.msra.mxu0 0.0
    %577 = vmatprep.subr.mxu0 0.0
    %578 = vmatpush1.xpose.msra.mxu0 0.0
    %579 = vmatprep.subr.mxu0 0.0
    %580 = vmatpush1.xpose.msra.mxu0 0.0
    %581 = vmatprep.subr.mxu0 0.0
    %582 = vmatpush1.xpose.msra.mxu0 0.0
    %583 = vmatprep.subr.mxu0 0.0
    %584 = vmatpush1.xpose.msra.mxu0 0.0
    %585 = vmatprep.subr.mxu0 0.0
    %586 = vmatpush1.xpose.msra.mxu0 0.0
    %587 = vmatprep.subr.mxu0 0.0
    %588 = vmatpush1.xpose.msra.mxu0 0.0
    %589 = vmatprep.subr.mxu0 0.0
    %590 = vmatpush1.xpose.msra.mxu0 0.0
    %591 = vmatprep.subr.mxu0 0.0
    %592 = vmatpush1.xpose.msra.mxu0 0.0
    %593 = vmatprep.subr.mxu0 0.0
    %594 = vmatpush1.xpose.msra.mxu0 0.0
    %595 = vmatprep.subr.mxu0 0.0
    %596 = vmatpush1.xpose.msra.mxu0 0.0
    %597 = vmatprep.mubr.f32.mxu0 0.0
    %598 = vmatmul.mubr.f32.gmra.mrb[0].mxu0 %v529
    %v599 = vpop.f32.mrb[0].mxu0
    %v600 = vadd.f32 0.0, %v599
    %v601 = vpop.f32.mrb[0].mxu0
    %602 = vdwg.mxu0
    %603 = vrot.lane.b32.xlu0 %v176, 112
    %v604 = vpop.permute.xlu0 %603
    %605 = vrot.lane.b32.xlu0 %v176, 80
    %v606 = vpop.permute.xlu0 %605
    %v607 = vsel %vm182, %v604, 0
    %v609 = vsel %vm182, %v606, 0
    %611 = vmatprep.subr.mxu0 0.0
    %612 = vmatpush1.xpose.msra.mxu0 %v609
    %613 = vmatprep.subr.mxu0 0.0
    %614 = vmatpush1.xpose.msra.mxu0 0.0
    %615 = vmatprep.subr.mxu0 0.0
    %616 = vmatpush1.xpose.msra.mxu0 0.0
    %617 = vmatprep.subr.mxu0 0.0
    %618 = vmatpush1.xpose.msra.mxu0 0.0
    %619 = vmatprep.subr.mxu0 0.0
    %620 = vmatpush1.xpose.msra.mxu0 0.0
    %621 = vmatprep.subr.mxu0 0.0
    %622 = vmatpush1.xpose.msra.mxu0 0.0
    %623 = vmatprep.subr.mxu0 0.0
    %624 = vmatpush1.xpose.msra.mxu0 0.0
    %625 = vmatprep.subr.mxu0 0.0
    %626 = vmatpush1.xpose.msra.mxu0 0.0
    %627 = vmatprep.subr.mxu0 0.0
    %628 = vmatpush1.xpose.msra.mxu0 0.0
    %629 = vmatprep.subr.mxu0 0.0
    %630 = vmatpush1.xpose.msra.mxu0 0.0
    %631 = vmatprep.subr.mxu0 0.0
    %632 = vmatpush1.xpose.msra.mxu0 0.0
    %633 = vmatprep.subr.mxu0 0.0
    %634 = vmatpush1.xpose.msra.mxu0 0.0
    %635 = vmatprep.subr.mxu0 0.0
    %636 = vmatpush1.xpose.msra.mxu0 0.0
    %637 = vmatprep.subr.mxu0 0.0
    %638 = vmatpush1.xpose.msra.mxu0 0.0
    %639 = vmatprep.subr.mxu0 0.0
    %640 = vmatpush1.xpose.msra.mxu0 0.0
    %641 = vmatprep.subr.mxu0 0.0
    %642 = vmatpush1.xpose.msra.mxu0 0.0
    %643 = vmatprep.subr.mxu0 0.0
    %644 = vmatpush1.xpose.msra.mxu0 0.0
    %645 = vmatprep.subr.mxu0 0.0
    %646 = vmatpush1.xpose.msra.mxu0 0.0
    %647 = vmatprep.subr.mxu0 0.0
    %648 = vmatpush1.xpose.msra.mxu0 0.0
    %649 = vmatprep.subr.mxu0 0.0
    %650 = vmatpush1.xpose.msra.mxu0 0.0
    %651 = vmatprep.subr.mxu0 0.0
    %652 = vmatpush1.xpose.msra.mxu0 0.0
    %653 = vmatprep.subr.mxu0 0.0
    %654 = vmatpush1.xpose.msra.mxu0 0.0
    %655 = vmatprep.subr.mxu0 0.0
    %656 = vmatpush1.xpose.msra.mxu0 0.0
    %657 = vmatprep.subr.mxu0 0.0
    %658 = vmatpush1.xpose.msra.mxu0 0.0
    %659 = vmatprep.subr.mxu0 0.0
    %660 = vmatpush1.xpose.msra.mxu0 0.0
    %661 = vmatprep.subr.mxu0 0.0
    %662 = vmatpush1.xpose.msra.mxu0 0.0
    %663 = vmatprep.subr.mxu0 0.0
    %664 = vmatpush1.xpose.msra.mxu0 0.0
    %665 = vmatprep.subr.mxu0 0.0
    %666 = vmatpush1.xpose.msra.mxu0 0.0
    %667 = vmatprep.subr.mxu0 0.0
    %668 = vmatpush1.xpose.msra.mxu0 0.0
    %669 = vmatprep.subr.mxu0 0.0
    %670 = vmatpush1.xpose.msra.mxu0 0.0
    %671 = vmatprep.subr.mxu0 0.0
    %672 = vmatpush1.xpose.msra.mxu0 0.0
    %673 = vmatprep.subr.mxu0 0.0
    %674 = vmatpush1.xpose.msra.mxu0 0.0
    %675 = vmatprep.mubr.f32.mxu0 0.0
    %676 = vmatmul.mubr.f32.gmra.mrb[0].mxu0 %v607
    %v677 = vpop.f32.mrb[0].mxu0
    %v678 = vadd.f32 0.0, %v677
    %v679 = vpop.f32.mrb[0].mxu0
    %680 = vdwg.mxu0
    %v681 = vmul.f32 %v600, 0.25
    %v682 = vmul.f32 %v678, 0.25
    %v683 = vadd.f32 %v681, %v341
    %v684 = vadd.f32 %v682, %v345
    %v685 = vsel %vm350, %v683, -inf
    %686 = vmax.xlane.f32.xlu0 %v685
    %v687 = vpop.xlane.xlu0 %686
    %v688 = vsel %vm350, %v684, -inf
    %689 = vmax.xlane.f32.xlu0 %v688
    %v690 = vpop.xlane.xlu0 %689
    %v691 = vsub.f32 %v683, %v687
    %v692 = vsub.f32 %v684, %v690
    %v693 = vmul.f32 %v691, 1.442695
    %v694 = vpow.pop %v693
    %v695 = vmul.f32 %v692, 1.442695
    %v696 = vpow.pop %v695
    %v697 = vsel %vm350, %v694, 0.0
    %698 = vadd.xlane.f32.xlu0 %v697
    %v699 = vpop.xlane.xlu0 %698
    %v700 = vsel %vm350, %v696, 0.0
    %701 = vadd.xlane.f32.xlu0 %v700
    %v702 = vpop.xlane.xlu0 %701
    %v703 = vrcp.pop %v699
    %v704 = vrcp.pop %v702
    %v705 = vmul.f32 %v694, %v703
    %v706 = vmul.f32 %v696, %v704
    %707 = vrot.lane.b32.xlu0 %v173, 48
    %v708 = vpop.permute.xlu0 %707
    %v711 = vsel %vm350, %v705, 0
    %713 = vmatprep.subr.mxu0 0.0
    %714 = vmatpush1.msra.mxu0 %v708
    %715 = vmatprep.subr.mxu0 0.0
    %716 = vmatpush1.msra.mxu0 0.0
    %717 = vmatprep.subr.mxu0 0.0
    %718 = vmatpush1.msra.mxu0 0.0
    %719 = vmatprep.subr.mxu0 0.0
    %720 = vmatpush1.msra.mxu0 0.0
    %721 = vmatprep.subr.mxu0 0.0
    %722 = vmatpush1.msra.mxu0 0.0
    %723 = vmatprep.subr.mxu0 0.0
    %724 = vmatpush1.msra.mxu0 0.0
    %725 = vmatprep.subr.mxu0 0.0
    %726 = vmatpush1.msra.mxu0 0.0
    %727 = vmatprep.subr.mxu0 0.0
    %728 = vmatpush1.msra.mxu0 0.0
    %729 = vmatprep.subr.mxu0 0.0
    %730 = vmatpush1.msra.mxu0 0.0
    %731 = vmatprep.subr.mxu0 0.0
    %732 = vmatpush1.msra.mxu0 0.0
    %733 = vmatprep.subr.mxu0 0.0
    %734 = vmatpush1.msra.mxu0 0.0
    %735 = vmatprep.subr.mxu0 0.0
    %736 = vmatpush1.msra.mxu0 0.0
    %737 = vmatprep.subr.mxu0 0.0
    %738 = vmatpush1.msra.mxu0 0.0
    %739 = vmatprep.subr.mxu0 0.0
    %740 = vmatpush1.msra.mxu0 0.0
    %741 = vmatprep.subr.mxu0 0.0
    %742 = vmatpush1.msra.mxu0 0.0
    %743 = vmatprep.subr.mxu0 0.0
    %744 = vmatpush1.msra.mxu0 0.0
    %745 = vmatprep.subr.mxu0 0.0
    %746 = vmatpush1.msra.mxu0 0.0
    %747 = vmatprep.subr.mxu0 0.0
    %748 = vmatpush1.msra.mxu0 0.0
    %749 = vmatprep.subr.mxu0 0.0
    %750 = vmatpush1.msra.mxu0 0.0
    %751 = vmatprep.subr.mxu0 0.0
    %752 = vmatpush1.msra.mxu0 0.0
    %753 = vmatprep.subr.mxu0 0.0
    %754 = vmatpush1.msra.mxu0 0.0
    %755 = vmatprep.subr.mxu0 0.0
    %756 = vmatpush1.msra.mxu0 0.0
    %757 = vmatprep.subr.mxu0 0.0
    %758 = vmatpush1.msra.mxu0 0.0
    %759 = vmatprep.subr.mxu0 0.0
    %760 = vmatpush1.msra.mxu0 0.0
    %761 = vmatprep.subr.mxu0 0.0
    %762 = vmatpush1.msra.mxu0 0.0
    %763 = vmatprep.subr.mxu0 0.0
    %764 = vmatpush1.msra.mxu0 0.0
    %765 = vmatprep.subr.mxu0 0.0
    %766 = vmatpush1.msra.mxu0 0.0
    %767 = vmatprep.subr.mxu0 0.0
    %768 = vmatpush1.msra.mxu0 0.0
    %769 = vmatprep.subr.mxu0 0.0
    %770 = vmatpush1.msra.mxu0 0.0
    %771 = vmatprep.subr.mxu0 0.0
    %772 = vmatpush1.msra.mxu0 0.0
    %773 = vmatprep.subr.mxu0 0.0
    %774 = vmatpush1.msra.mxu0 0.0
    %775 = vmatprep.subr.mxu0 0.0
    %776 = vmatpush1.msra.mxu0 0.0
    %777 = vmatprep.mubr.f32.mxu0 0.0
    %778 = vmatmul.mubr.f32.gmra.mrb[0].mxu0 %v711
    %v779 = vpop.f32.mrb[0].mxu0
    %v780 = vadd.f32 0.0, %v779
    %v781 = vpop.f32.mrb[0].mxu0
    %782 = vdwg.mxu0
    %783 = vrot.lane.b32.xlu0 %v176, 48
    %v784 = vpop.permute.xlu0 %783
    %v787 = vsel %vm350, %v706, 0
    %789 = vmatprep.subr.mxu0 0.0
    %790 = vmatpush1.msra.mxu0 %v784
    %791 = vmatprep.subr.mxu0 0.0
    %792 = vmatpush1.msra.mxu0 0.0
    %793 = vmatprep.subr.mxu0 0.0
    %794 = vmatpush1.msra.mxu0 0.0
    %795 = vmatprep.subr.mxu0 0.0
    %796 = vmatpush1.msra.mxu0 0.0
    %797 = vmatprep.subr.mxu0 0.0
    %798 = vmatpush1.msra.mxu0 0.0
    %799 = vmatprep.subr.mxu0 0.0
    %800 = vmatpush1.msra.mxu0 0.0
    %801 = vmatprep.subr.mxu0 0.0
    %802 = vmatpush1.msra.mxu0 0.0
    %803 = vmatprep.subr.mxu0 0.0
    %804 = vmatpush1.msra.mxu0 0.0
    %805 = vmatprep.subr.mxu0 0.0
    %806 = vmatpush1.msra.mxu0 0.0
    %807 = vmatprep.subr.mxu0 0.0
    %808 = vmatpush1.msra.mxu0 0.0
    %809 = vmatprep.subr.mxu0 0.0
    %810 = vmatpush1.msra.mxu0 0.0
    %811 = vmatprep.subr.mxu0 0.0
    %812 = vmatpush1.msra.mxu0 0.0
    %813 = vmatprep.subr.mxu0 0.0
    %814 = vmatpush1.msra.mxu0 0.0
    %815 = vmatprep.subr.mxu0 0.0
    %816 = vmatpush1.msra.mxu0 0.0
    %817 = vmatprep.subr.mxu0 0.0
    %818 = vmatpush1.msra.mxu0 0.0
    %819 = vmatprep.subr.mxu0 0.0
    %820 = vmatpush1.msra.mxu0 0.0
    %821 = vmatprep.subr.mxu0 0.0
    %822 = vmatpush1.msra.mxu0 0.0
    %823 = vmatprep.subr.mxu0 0.0
    %824 = vmatpush1.msra.mxu0 0.0
    %825 = vmatprep.subr.mxu0 0.0
    %826 = vmatpush1.msra.mxu0 0.0
    %827 = vmatprep.subr.mxu0 0.0
    %828 = vmatpush1.msra.mxu0 0.0
    %829 = vmatprep.subr.mxu0 0.0
    %830 = vmatpush1.msra.mxu0 0.0
    %831 = vmatprep.subr.mxu0 0.0
    %832 = vmatpush1.msra.mxu0 0.0
    %833 = vmatprep.subr.mxu0 0.0
    %834 = vmatpush1.msra.mxu0 0.0
    %835 = vmatprep.subr.mxu0 0.0
    %836 = vmatpush1.msra.mxu0 0.0
    %837 = vmatprep.subr.mxu0 0.0
    %838 = vmatpush1.msra.mxu0 0.0
    %839 = vmatprep.subr.mxu0 0.0
    %840 = vmatpush1.msra.mxu0 0.0
    %841 = vmatprep.subr.mxu0 0.0
    %842 = vmatpush1.msra.mxu0 0.0
    %843 = vmatprep.subr.mxu0 0.0
    %844 = vmatpush1.msra.mxu0 0.0
    %845 = vmatprep.subr.mxu0 0.0
    %846 = vmatpush1.msra.mxu0 0.0
    %847 = vmatprep.subr.mxu0 0.0
    %848 = vmatpush1.msra.mxu0 0.0
    %849 = vmatprep.subr.mxu0 0.0
    %850 = vmatpush1.msra.mxu0 0.0
    %851 = vmatprep.subr.mxu0 0.0
    %852 = vmatpush1.msra.mxu0 0.0
    %853 = vmatprep.mubr.f32.mxu0 0.0
    %854 = vmatmul.mubr.f32.gmra.mrb[0].mxu0 %v787
    %v855 = vpop.f32.mrb[0].mxu0
    %v856 = vadd.f32 0.0, %v855
    %v857 = vpop.f32.mrb[0].mxu0
    %858 = vdwg.mxu0
    %861 = vrot.lane.b32.xlu0 %v780, 16
    %v862 = vpop.permute.xlu0 %861
    %863 = vrot.lane.b32.xlu0 %v856, 16
    %v864 = vpop.permute.xlu0 %863
    %v867 = vsel %vm182, %v446, %v862
    %v868 = vsel %vm182, %v522, %v864
    %v869 = vld [vmem:[%s6] sm:$0xf]
    %v870 = vld [vmem:[%s6 + $0x4] sm:$0xf]
    %v871 = vld [vmem:[%s6 + $0x8] sm:$0xf]
    %v872 = vld [vmem:[%s6 + $0xc] sm:$0xf]
    %v873 = vpack.c.bf16 %v868, %v867
    %v874 = vld [vmem:[%s7] sm:$0x1]
    %v876 = vlaneseq
    %v877 = vshrl.u32 %v876, 7
    %v878 = vsub.s32 0, %v877
    %v879 = vrot.slane %v874, %v878
    %v885 = vunpack.c.l.b16 %v869
    %v886 = vunpack.c.l.b16 %v870
    %v887 = vunpack.c.l.b16 %v871
    %v888 = vunpack.c.l.b16 %v872
    %v889 = vpack.c.b16 %v886, %v885
    %v890 = vpack.c.b16 %v888, %v887
    %v894 = vsel %vm65, %v873, 0
    %896 = vmatprep.subr.bf16.mxu0 0
    %897 = vmatpush1.bf16.msra.mxu0 %v889
    %898 = vmatprep.subr.bf16.mxu0 0
    %899 = vmatpush1.bf16.msra.mxu0 %v890
    %900 = vmatprep.subr.bf16.mxu0 0
    %901 = vmatpush1.bf16.msra.mxu0 0
    %902 = vmatprep.subr.bf16.mxu0 0
    %903 = vmatpush1.bf16.msra.mxu0 0
    %904 = vmatprep.subr.bf16.mxu0 0
    %905 = vmatpush1.bf16.msra.mxu0 0
    %906 = vmatprep.subr.bf16.mxu0 0
    %907 = vmatpush1.bf16.msra.mxu0 0
    %908 = vmatprep.subr.bf16.mxu0 0
    %909 = vmatpush1.bf16.msra.mxu0 0
    %910 = vmatprep.subr.bf16.mxu0 0
    %911 = vmatpush1.bf16.msra.mxu0 0
    %912 = vmatprep.subr.bf16.mxu0 0
    %913 = vmatpush1.bf16.msra.mxu0 0
    %914 = vmatprep.subr.bf16.mxu0 0
    %915 = vmatpush1.bf16.msra.mxu0 0
    %916 = vmatprep.subr.bf16.mxu0 0
    %917 = vmatpush1.bf16.msra.mxu0 0
    %918 = vmatprep.subr.bf16.mxu0 0
    %919 = vmatpush1.bf16.msra.mxu0 0
    %920 = vmatprep.subr.bf16.mxu0 0
    %921 = vmatpush1.bf16.msra.mxu0 0
    %922 = vmatprep.subr.bf16.mxu0 0
    %923 = vmatpush1.bf16.msra.mxu0 0
    %924 = vmatprep.subr.bf16.mxu0 0
    %925 = vmatpush1.bf16.msra.mxu0 0
    %926 = vmatprep.subr.bf16.mxu0 0
    %927 = vmatpush1.bf16.msra.mxu0 0
    %928 = vmatprep.mubr.bf16.mxu0 0
    %929 = vmatmul.mubr.bf16.gmra.mrb[0].mxu0 %v894
    %v930 = vpop.f32.mrb[0].mxu0
    %v931 = vadd.f32 %v879, %v930
    %v932 = vpop.f32.mrb[0].mxu0
    %v933 = vpop.f32.mrb[0].mxu0
    %v934 = vadd.f32 %v879, %v933
    %v935 = vpop.f32.mrb[0].mxu0
    %936 = vdwg.mxu0
    %v937 = vadd.f32 %v931, %v107
    %v938 = vadd.f32 %v934, %v108
    %v939 = vld [vmem:[%s8] sm:$0x1]
    %v940 = vld [vmem:[%s9] sm:$0x1]
    %v941 = vsel %vm65, %v937, 0.0
    %942 = vadd.xlane.f32.xlu0 %v941
    %v943 = vpop.xlane.xlu0 %942
    %v944 = vsel %vm65, %v938, 0.0
    %945 = vadd.xlane.f32.xlu0 %v944
    %v946 = vpop.xlane.xlu0 %945
    %v947 = vmul.f32 %v943, %v72
    %v948 = vmul.f32 %v946, %v72
    %v949 = vsub.f32 %v937, %v947
    %v950 = vsub.f32 %v938, %v948
    %v951 = vmul.f32 %v949, %v949
    %v952 = vmul.f32 %v950, %v950
    %v953 = vsel %vm65, %v951, 0.0
    %954 = vadd.xlane.f32.xlu0 %v953
    %v955 = vpop.xlane.xlu0 %954
    %v956 = vsel %vm65, %v952, 0.0
    %957 = vadd.xlane.f32.xlu0 %v956
    %v958 = vpop.xlane.xlu0 %957
    %v959 = vmul.f32 %v955, %v72
    %v960 = vmul.f32 %v958, %v72
    %v961 = vadd.f32 %v959, 1e-12
    %v962 = vadd.f32 %v960, 1e-12
    %v963 = vrsqrt.pop %v961
    %v964 = vrsqrt.pop %v962
    %v965 = vmul.f32 %v949, %v963
    %v966 = vmul.f32 %v950, %v964
    %v968 = vlaneseq
    %v969 = vshrl.u32 %v968, 7
    %v970 = vsub.s32 0, %v969
    %v971 = vrot.slane %v939, %v970
    %v973 = vmul.f32 %v965, %v971
    %v974 = vmul.f32 %v966, %v971
    %v976 = vlaneseq
    %v977 = vshrl.u32 %v976, 7
    %v978 = vsub.s32 0, %v977
    %v979 = vrot.slane %v940, %v978
    %v981 = vadd.f32 %v973, %v979
    %v982 = vadd.f32 %v974, %v979
    %v983 = vld [vmem:[%s10] sm:$0xf]
    %v984 = vld [vmem:[%s10 + $0x4] sm:$0xf]
    %v985 = vld [vmem:[%s10 + $0x8] sm:$0xf]
    %v986 = vld [vmem:[%s10 + $0xc] sm:$0xf]
    %v987 = vpack.c.bf16 %v982, %v981
    %v988 = vld [vmem:[%s11] sm:$0x1]
    %v990 = vlaneseq
    %v991 = vshrl.u32 %v990, 7
    %v992 = vsub.s32 0, %v991
    %v993 = vrot.slane %v988, %v992
    %v999 = vunpack.c.l.b16 %v983
    %v1000 = vunpack.c.l.b16 %v984
    %v1001 = vunpack.c.l.b16 %v985
    %v1002 = vunpack.c.l.b16 %v986
    %v1003 = vpack.c.b16 %v1000, %v999
    %v1004 = vpack.c.b16 %v1002, %v1001
    %v1008 = vsel %vm65, %v987, 0
    %1010 = vmatprep.subr.bf16.mxu0 0
    %1011 = vmatpush1.bf16.msra.mxu0 %v1003
    %1012 = vmatprep.subr.bf16.mxu0 0
    %1013 = vmatpush1.bf16.msra.mxu0 %v1004
    %1014 = vmatprep.subr.bf16.mxu0 0
    %1015 = vmatpush1.bf16.msra.mxu0 0
    %1016 = vmatprep.subr.bf16.mxu0 0
    %1017 = vmatpush1.bf16.msra.mxu0 0
    %1018 = vmatprep.subr.bf16.mxu0 0
    %1019 = vmatpush1.bf16.msra.mxu0 0
    %1020 = vmatprep.subr.bf16.mxu0 0
    %1021 = vmatpush1.bf16.msra.mxu0 0
    %1022 = vmatprep.subr.bf16.mxu0 0
    %1023 = vmatpush1.bf16.msra.mxu0 0
    %1024 = vmatprep.subr.bf16.mxu0 0
    %1025 = vmatpush1.bf16.msra.mxu0 0
    %1026 = vmatprep.subr.bf16.mxu0 0
    %1027 = vmatpush1.bf16.msra.mxu0 0
    %1028 = vmatprep.subr.bf16.mxu0 0
    %1029 = vmatpush1.bf16.msra.mxu0 0
    %1030 = vmatprep.subr.bf16.mxu0 0
    %1031 = vmatpush1.bf16.msra.mxu0 0
    %1032 = vmatprep.subr.bf16.mxu0 0
    %1033 = vmatpush1.bf16.msra.mxu0 0
    %1034 = vmatprep.subr.bf16.mxu0 0
    %1035 = vmatpush1.bf16.msra.mxu0 0
    %1036 = vmatprep.subr.bf16.mxu0 0
    %1037 = vmatpush1.bf16.msra.mxu0 0
    %1038 = vmatprep.subr.bf16.mxu0 0
    %1039 = vmatpush1.bf16.msra.mxu0 0
    %1040 = vmatprep.subr.bf16.mxu0 0
    %1041 = vmatpush1.bf16.msra.mxu0 0
    %1042 = vmatprep.mubr.bf16.mxu0 0
    %1043 = vmatmul.mubr.bf16.gmra.mrb[0].mxu0 %v1008
    %v1044 = vpop.f32.mrb[0].mxu0
    %v1045 = vadd.f32 %v993, %v1044
    %v1046 = vpop.f32.mrb[0].mxu0
    %v1047 = vpop.f32.mrb[0].mxu0
    %v1048 = vadd.f32 %v993, %v1047
    %v1049 = vpop.f32.mrb[0].mxu0
    %1050 = vdwg.mxu0
    %v1051 = vmul.f32 %v1045, %v1045
    %v1052 = vmul.f32 %v1048, %v1048
    %v1053 = vmul.f32 %v1045, %v1051
    %v1054 = vmul.f32 %v1048, %v1052
    %v1055 = vmul.f32 %v1053, 0.044715
    %v1056 = vmul.f32 %v1054, 0.044715
    %v1057 = vadd.f32 %v1045, %v1055
    %v1058 = vadd.f32 %v1048, %v1056
    %v1059 = vmul.f32 %v1057, 0.7978846
    %v1060 = vmul.f32 %v1058, 0.7978846
    %v1061 = vtanh.pop %v1059
    %v1062 = vtanh.pop %v1060
    %v1063 = vadd.f32 %v1061, 1.0
    %v1064 = vadd.f32 %v1062, 1.0
    %v1065 = vmul.f32 %v1063, 0.5
    %v1066 = vmul.f32 %v1064, 0.5
    %v1067 = vmul.f32 %v1045, %v1065
    %v1068 = vmul.f32 %v1048, %v1066
    %v1069 = vld [vmem:[%s12] sm:$0xf]
    %v1070 = vld [vmem:[%s12 + $0x4] sm:$0xf]
    %v1071 = vld [vmem:[%s12 + $0x8] sm:$0xf]
    %v1072 = vld [vmem:[%s12 + $0xc] sm:$0xf]
    %v1073 = vld [vmem:[%s12 + $0x10] sm:$0xf]
    %v1074 = vld [vmem:[%s12 + $0x14] sm:$0xf]
    %v1075 = vld [vmem:[%s12 + $0x18] sm:$0xf]
    %v1076 = vld [vmem:[%s12 + $0x1c] sm:$0xf]
    %v1077 = vpack.c.bf16 %v1068, %v1067
    %v1078 = vld [vmem:[%s13] sm:$0x1]
    %v1080 = vlaneseq
    %v1081 = vshrl.u32 %v1080, 7
    %v1082 = vsub.s32 0, %v1081
    %v1083 = vrot.slane %v1078, %v1082
    %v1093 = vunpack.c.l.b16 %v1069
    %v1094 = vunpack.c.l.b16 %v1070
    %v1095 = vunpack.c.l.b16 %v1071
    %v1096 = vunpack.c.l.b16 %v1072
    %v1097 = vunpack.c.l.b16 %v1073
    %v1098 = vunpack.c.l.b16 %v1074
    %v1099 = vunpack.c.l.b16 %v1075
    %v1100 = vunpack.c.l.b16 %v1076
    %v1101 = vpack.c.b16 %v1094, %v1093
    %v1102 = vpack.c.b16 %v1096, %v1095
    %v1103 = vpack.c.b16 %v1098, %v1097
    %v1104 = vpack.c.b16 %v1100, %v1099
    %vm1109 = vcmask 523264
    %v1111 = vsel %vm1109, %v1077, 0
    %1113 = vmatprep.subr.bf16.mxu0 0
    %1114 = vmatpush1.bf16.msra.mxu0 %v1101
    %1115 = vmatprep.subr.bf16.mxu0 0
    %1116 = vmatpush1.bf16.msra.mxu0 %v1102
    %1117 = vmatprep.subr.bf16.mxu0 0
    %1118 = vmatpush1.bf16.msra.mxu0 %v1103
    %1119 = vmatprep.subr.bf16.mxu0 0
    %1120 = vmatpush1.bf16.msra.mxu0 %v1104
    %1121 = vmatprep.subr.bf16.mxu0 0
    %1122 = vmatpush1.bf16.msra.mxu0 0
    %1123 = vmatprep.subr.bf16.mxu0 0
    %1124 = vmatpush1.bf16.msra.mxu0 0
    %1125 = vmatprep.subr.bf16.mxu0 0
    %1126 = vmatpush1.bf16.msra.mxu0 0
    %1127 = vmatprep.subr.bf16.mxu0 0
    %1128 = vmatpush1.bf16.msra.mxu0 0
    %1129 = vmatprep.subr.bf16.mxu0 0
    %1130 = vmatpush1.bf16.msra.mxu0 0
    %1131 = vmatprep.subr.bf16.mxu0 0
    %1132 = vmatpush1.bf16.msra.mxu0 0
    %1133 = vmatprep.subr.bf16.mxu0 0
    %1134 = vmatpush1.bf16.msra.mxu0 0
    %1135 = vmatprep.subr.bf16.mxu0 0
    %1136 = vmatpush1.bf16.msra.mxu0 0
    %1137 = vmatprep.subr.bf16.mxu0 0
    %1138 = vmatpush1.bf16.msra.mxu0 0
    %1139 = vmatprep.subr.bf16.mxu0 0
    %1140 = vmatpush1.bf16.msra.mxu0 0
    %1141 = vmatprep.subr.bf16.mxu0 0
    %1142 = vmatpush1.bf16.msra.mxu0 0
    %1143 = vmatprep.subr.bf16.mxu0 0
    %1144 = vmatpush1.bf16.msra.mxu0 0
    %1145 = vmatprep.mubr.bf16.mxu0 0
    %1146 = vmatmul.mubr.bf16.gmra.mrb[0].mxu0 %v1111
    %v1147 = vpop.f32.mrb[0].mxu0
    %v1148 = vadd.f32 %v1083, %v1147
    %v1149 = vpop.f32.mrb[0].mxu0
    %v1150 = vpop.f32.mrb[0].mxu0
    %v1151 = vadd.f32 %v1083, %v1150
    %v1152 = vpop.f32.mrb[0].mxu0
    %1153 = vdwg.mxu0
    %v1154 = vadd.f32 %v1148, %v981
    %v1155 = vadd.f32 %v1151, %v982
    %v1156 = vld [vmem:[%s14] sm:$0x1]
    %v1157 = vld [vmem:[%s15] sm:$0x1]
    %v1158 = vsel %vm65, %v1154, 0.0
    %1159 = vadd.xlane.f32.xlu0 %v1158
    %v1160 = vpop.xlane.xlu0 %1159
    %v1161 = vsel %vm65, %v1155, 0.0
    %1162 = vadd.xlane.f32.xlu0 %v1161
    %v1163 = vpop.xlane.xlu0 %1162
    %v1164 = vmul.f32 %v1160, %v72
    %v1165 = vmul.f32 %v1163, %v72
    %v1166 = vsub.f32 %v1154, %v1164
    %v1167 = vsub.f32 %v1155, %v1165
    %v1168 = vmul.f32 %v1166, %v1166
    %v1169 = vmul.f32 %v1167, %v1167
    %v1170 = vsel %vm65, %v1168, 0.0
    %1171 = vadd.xlane.f32.xlu0 %v1170
    %v1172 = vpop.xlane.xlu0 %1171
    %v1173 = vsel %vm65, %v1169, 0.0
    %1174 = vadd.xlane.f32.xlu0 %v1173
    %v1175 = vpop.xlane.xlu0 %1174
    %v1176 = vmul.f32 %v1172, %v72
    %v1177 = vmul.f32 %v1175, %v72
    %v1178 = vadd.f32 %v1176, 1e-12
    %v1179 = vadd.f32 %v1177, 1e-12
    %v1180 = vrsqrt.pop %v1178
    %v1181 = vrsqrt.pop %v1179
    %v1182 = vmul.f32 %v1166, %v1180
    %v1183 = vmul.f32 %v1167, %v1181
    %v1185 = vlaneseq
    %v1186 = vshrl.u32 %v1185, 7
    %v1187 = vsub.s32 0, %v1186
    %v1188 = vrot.slane %v1156, %v1187
    %v1190 = vmul.f32 %v1182, %v1188
    %v1191 = vmul.f32 %v1183, %v1188
    %v1193 = vlaneseq
    %v1194 = vshrl.u32 %v1193, 7
    %v1195 = vsub.s32 0, %v1194
    %v1196 = vrot.slane %v1157, %v1195
    %v1198 = vadd.f32 %v1190, %v1196
    %v1199 = vadd.f32 %v1191, %v1196
    %s1200 = scalar_lea.vmem %s4, 16
    %v1201 = vld [vmem:[%s1200] sm:$0xf]
    %v1202 = vld [vmem:[%s1200 + $0x4] sm:$0xf]
    %v1203 = vld [vmem:[%s1200 + $0x8] sm:$0xf]
    %v1204 = vld [vmem:[%s1200 + $0xc] sm:$0xf]
    %v1205 = vpack.c.bf16 %v1199, %v1198
    %s1206 = scalar_lea.vmem %s5, 1
    %v1207 = vld [vmem:[%s1206] sm:$0x1]
    %v1209 = vlaneseq
    %v1210 = vshrl.u32 %v1209, 7
    %v1211 = vsub.s32 0, %v1210
    %v1212 = vrot.slane %v1207, %v1211
    %v1218 = vunpack.c.l.b16 %v1201
    %v1219 = vunpack.c.l.b16 %v1202
    %v1220 = vunpack.c.l.b16 %v1203
    %v1221 = vunpack.c.l.b16 %v1204
    %v1222 = vpack.c.b16 %v1219, %v1218
    %v1223 = vpack.c.b16 %v1221, %v1220
    %v1227 = vsel %vm65, %v1205, 0
    %1229 = vmatprep.subr.bf16.mxu0 0
    %1230 = vmatpush1.bf16.msra.mxu0 %v1222
    %1231 = vmatprep.subr.bf16.mxu0 0
    %1232 = vmatpush1.bf16.msra.mxu0 %v1223
    %1233 = vmatprep.subr.bf16.mxu0 0
    %1234 = vmatpush1.bf16.msra.mxu0 0
    %1235 = vmatprep.subr.bf16.mxu0 0
    %1236 = vmatpush1.bf16.msra.mxu0 0
    %1237 = vmatprep.subr.bf16.mxu0 0
    %1238 = vmatpush1.bf16.msra.mxu0 0
    %1239 = vmatprep.subr.bf16.mxu0 0
    %1240 = vmatpush1.bf16.msra.mxu0 0
    %1241 = vmatprep.subr.bf16.mxu0 0
    %1242 = vmatpush1.bf16.msra.mxu0 0
    %1243 = vmatprep.subr.bf16.mxu0 0
    %1244 = vmatpush1.bf16.msra.mxu0 0
    %1245 = vmatprep.subr.bf16.mxu0 0
    %1246 = vmatpush1.bf16.msra.mxu0 0
    %1247 = vmatprep.subr.bf16.mxu0 0
    %1248 = vmatpush1.bf16.msra.mxu0 0
    %1249 = vmatprep.subr.bf16.mxu0 0
    %1250 = vmatpush1.bf16.msra.mxu0 0
    %1251 = vmatprep.subr.bf16.mxu0 0
    %1252 = vmatpush1.bf16.msra.mxu0 0
    %1253 = vmatprep.subr.bf16.mxu0 0
    %1254 = vmatpush1.bf16.msra.mxu0 0
    %1255 = vmatprep.subr.bf16.mxu0 0
    %1256 = vmatpush1.bf16.msra.mxu0 0
    %1257 = vmatprep.subr.bf16.mxu0 0
    %1258 = vmatpush1.bf16.msra.mxu0 0
    %1259 = vmatprep.subr.bf16.mxu0 0
    %1260 = vmatpush1.bf16.msra.mxu0 0
    %1261 = vmatprep.mubr.bf16.mxu0 0
    %1262 = vmatmul.mubr.bf16.gmra.mrb[0].mxu0 %v1227
    %v1263 = vpop.f32.mrb[0].mxu0
    %v1264 = vadd.f32 %v1212, %v1263
    %v1265 = vpop.f32.mrb[0].mxu0
    %v1266 = vpop.f32.mrb[0].mxu0
    %v1267 = vadd.f32 %v1212, %v1266
    %v1268 = vpop.f32.mrb[0].mxu0
    %1269 = vdwg.mxu0
    %1271 = vrot.lane.b32.xlu0 %v1264, 96
    %v1272 = vpop.permute.xlu0 %1271
    %v1273 = vsel %vm182, %v1264, 0
    %v1275 = vsel %vm182, %v1272, 0
    %1277 = vmatprep.subr.mxu0 0.0
    %1278 = vmatpush1.xpose.msra.mxu0 %v1275
    %1279 = vmatprep.subr.mxu0 0.0
    %1280 = vmatpush1.xpose.msra.mxu0 0.0
    %1281 = vmatprep.subr.mxu0 0.0
    %1282 = vmatpush1.xpose.msra.mxu0 0.0
    %1283 = vmatprep.subr.mxu0 0.0
    %1284 = vmatpush1.xpose.msra.mxu0 0.0
    %1285 = vmatprep.subr.mxu0 0.0
    %1286 = vmatpush1.xpose.msra.mxu0 0.0
    %1287 = vmatprep.subr.mxu0 0.0
    %1288 = vmatpush1.xpose.msra.mxu0 0.0
    %1289 = vmatprep.subr.mxu0 0.0
    %1290 = vmatpush1.xpose.msra.mxu0 0.0
    %1291 = vmatprep.subr.mxu0 0.0
    %1292 = vmatpush1.xpose.msra.mxu0 0.0
    %1293 = vmatprep.subr.mxu0 0.0
    %1294 = vmatpush1.xpose.msra.mxu0 0.0
    %1295 = vmatprep.subr.mxu0 0.0
    %1296 = vmatpush1.xpose.msra.mxu0 0.0
    %1297 = vmatprep.subr.mxu0 0.0
    %1298 = vmatpush1.xpose.msra.mxu0 0.0
    %1299 = vmatprep.subr.mxu0 0.0
    %1300 = vmatpush1.xpose.msra.mxu0 0.0
    %1301 = vmatprep.subr.mxu0 0.0
    %1302 = vmatpush1.xpose.msra.mxu0 0.0
    %1303 = vmatprep.subr.mxu0 0.0
    %1304 = vmatpush1.xpose.msra.mxu0 0.0
    %1305 = vmatprep.subr.mxu0 0.0
    %1306 = vmatpush1.xpose.msra.mxu0 0.0
    %1307 = vmatprep.subr.mxu0 0.0
    %1308 = vmatpush1.xpose.msra.mxu0 0.0
    %1309 = vmatprep.subr.mxu0 0.0
    %1310 = vmatpush1.xpose.msra.mxu0 0.0
    %1311 = vmatprep.subr.mxu0 0.0
    %1312 = vmatpush1.xpose.msra.mxu0 0.0
    %1313 = vmatprep.subr.mxu0 0.0
    %1314 = vmatpush1.xpose.msra.mxu0 0.0
    %1315 = vmatprep.subr.mxu0 0.0
    %1316 = vmatpush1.xpose.msra.mxu0 0.0
    %1317 = vmatprep.subr.mxu0 0.0
    %1318 = vmatpush1.xpose.msra.mxu0 0.0
    %1319 = vmatprep.subr.mxu0 0.0
    %1320 = vmatpush1.xpose.msra.mxu0 0.0
    %1321 = vmatprep.subr.mxu0 0.0
    %1322 = vmatpush1.xpose.msra.mxu0 0.0
    %1323 = vmatprep.subr.mxu0 0.0
    %1324 = vmatpush1.xpose.msra.mxu0 0.0
    %1325 = vmatprep.subr.mxu0 0.0
    %1326 = vmatpush1.xpose.msra.mxu0 0.0
    %1327 = vmatprep.subr.mxu0 0.0
    %1328 = vmatpush1.xpose.msra.mxu0 0.0
    %1329 = vmatprep.subr.mxu0 0.0
    %1330 = vmatpush1.xpose.msra.mxu0 0.0
    %1331 = vmatprep.subr.mxu0 0.0
    %1332 = vmatpush1.xpose.msra.mxu0 0.0
    %1333 = vmatprep.subr.mxu0 0.0
    %1334 = vmatpush1.xpose.msra.mxu0 0.0
    %1335 = vmatprep.subr.mxu0 0.0
    %1336 = vmatpush1.xpose.msra.mxu0 0.0
    %1337 = vmatprep.subr.mxu0 0.0
    %1338 = vmatpush1.xpose.msra.mxu0 0.0
    %1339 = vmatprep.subr.mxu0 0.0
    %1340 = vmatpush1.xpose.msra.mxu0 0.0
    %1341 = vmatprep.mubr.f32.mxu0 0.0
    %1342 = vmatmul.mubr.f32.gmra.mrb[0].mxu0 %v1273
    %v1343 = vpop.f32.mrb[0].mxu0
    %v1344 = vadd.f32 0.0, %v1343
    %v1345 = vpop.f32.mrb[0].mxu0
    %1346 = vdwg.mxu0
    %1348 = vrot.lane.b32.xlu0 %v1267, 96
    %v1349 = vpop.permute.xlu0 %1348
    %v1350 = vsel %vm182, %v1267, 0
    %v1352 = vsel %vm182, %v1349, 0
    %1354 = vmatprep.subr.mxu0 0.0
    %1355 = vmatpush1.xpose.msra.mxu0 %v1352
    %1356 = vmatprep.subr.mxu0 0.0
    %1357 = vmatpush1.xpose.msra.mxu0 0.0
    %1358 = vmatprep.subr.mxu0 0.0
    %1359 = vmatpush1.xpose.msra.mxu0 0.0
    %1360 = vmatprep.subr.mxu0 0.0
    %1361 = vmatpush1.xpose.msra.mxu0 0.0
    %1362 = vmatprep.subr.mxu0 0.0
    %1363 = vmatpush1.xpose.msra.mxu0 0.0
    %1364 = vmatprep.subr.mxu0 0.0
    %1365 = vmatpush1.xpose.msra.mxu0 0.0
    %1366 = vmatprep.subr.mxu0 0.0
    %1367 = vmatpush1.xpose.msra.mxu0 0.0
    %1368 = vmatprep.subr.mxu0 0.0
    %1369 = vmatpush1.xpose.msra.mxu0 0.0
    %1370 = vmatprep.subr.mxu0 0.0
    %1371 = vmatpush1.xpose.msra.mxu0 0.0
    %1372 = vmatprep.subr.mxu0 0.0
    %1373 = vmatpush1.xpose.msra.mxu0 0.0
    %1374 = vmatprep.subr.mxu0 0.0
    %1375 = vmatpush1.xpose.msra.mxu0 0.0
    %1376 = vmatprep.subr.mxu0 0.0
    %1377 = vmatpush1.xpose.msra.mxu0 0.0
    %1378 = vmatprep.subr.mxu0 0.0
    %1379 = vmatpush1.xpose.msra.mxu0 0.0
    %1380 = vmatprep.subr.mxu0 0.0
    %1381 = vmatpush1.xpose.msra.mxu0 0.0
    %1382 = vmatprep.subr.mxu0 0.0
    %1383 = vmatpush1.xpose.msra.mxu0 0.0
    %1384 = vmatprep.subr.mxu0 0.0
    %1385 = vmatpush1.xpose.msra.mxu0 0.0
    %1386 = vmatprep.subr.mxu0 0.0
    %1387 = vmatpush1.xpose.msra.mxu0 0.0
    %1388 = vmatprep.subr.mxu0 0.0
    %1389 = vmatpush1.xpose.msra.mxu0 0.0
    %1390 = vmatprep.subr.mxu0 0.0
    %1391 = vmatpush1.xpose.msra.mxu0 0.0
    %1392 = vmatprep.subr.mxu0 0.0
    %1393 = vmatpush1.xpose.msra.mxu0 0.0
    %1394 = vmatprep.subr.mxu0 0.0
    %1395 = vmatpush1.xpose.msra.mxu0 0.0
    %1396 = vmatprep.subr.mxu0 0.0
    %1397 = vmatpush1.xpose.msra.mxu0 0.0
    %1398 = vmatprep.subr.mxu0 0.0
    %1399 = vmatpush1.xpose.msra.mxu0 0.0
    %1400 = vmatprep.subr.mxu0 0.0
    %1401 = vmatpush1.xpose.msra.mxu0 0.0
    %1402 = vmatprep.subr.mxu0 0.0
    %1403 = vmatpush1.xpose.msra.mxu0 0.0
    %1404 = vmatprep.subr.mxu0 0.0
    %1405 = vmatpush1.xpose.msra.mxu0 0.0
    %1406 = vmatprep.subr.mxu0 0.0
    %1407 = vmatpush1.xpose.msra.mxu0 0.0
    %1408 = vmatprep.subr.mxu0 0.0
    %1409 = vmatpush1.xpose.msra.mxu0 0.0
    %1410 = vmatprep.subr.mxu0 0.0
    %1411 = vmatpush1.xpose.msra.mxu0 0.0
    %1412 = vmatprep.subr.mxu0 0.0
    %1413 = vmatpush1.xpose.msra.mxu0 0.0
    %1414 = vmatprep.subr.mxu0 0.0
    %1415 = vmatpush1.xpose.msra.mxu0 0.0
    %1416 = vmatprep.subr.mxu0 0.0
    %1417 = vmatpush1.xpose.msra.mxu0 0.0
    %1418 = vmatprep.mubr.f32.mxu0 0.0
    %1419 = vmatmul.mubr.f32.gmra.mrb[0].mxu0 %v1350
    %v1420 = vpop.f32.mrb[0].mxu0
    %v1421 = vadd.f32 0.0, %v1420
    %v1422 = vpop.f32.mrb[0].mxu0
    %1423 = vdwg.mxu0
    %v1424 = vmul.f32 %v1344, 0.25
    %v1425 = vmul.f32 %v1421, 0.25
    %v1426 = vadd.f32 %v1424, %v341
    %v1427 = vadd.f32 %v1425, %v345
    %v1428 = vsel %vm350, %v1426, -inf
    %1429 = vmax.xlane.f32.xlu0 %v1428
    %v1430 = vpop.xlane.xlu0 %1429
    %v1431 = vsel %vm350, %v1427, -inf
    %1432 = vmax.xlane.f32.xlu0 %v1431
    %v1433 = vpop.xlane.xlu0 %1432
    %v1434 = vsub.f32 %v1426, %v1430
    %v1435 = vsub.f32 %v1427, %v1433
    %v1436 = vmul.f32 %v1434, 1.442695
    %v1437 = vpow.pop %v1436
    %v1438 = vmul.f32 %v1435, 1.442695
    %v1439 = vpow.pop %v1438
    %v1440 = vsel %vm350, %v1437, 0.0
    %1441 = vadd.xlane.f32.xlu0 %v1440
    %v1442 = vpop.xlane.xlu0 %1441
    %v1443 = vsel %vm350, %v1439, 0.0
    %1444 = vadd.xlane.f32.xlu0 %v1443
    %v1445 = vpop.xlane.xlu0 %1444
    %v1446 = vrcp.pop %v1442
    %v1447 = vrcp.pop %v1445
    %v1448 = vmul.f32 %v1437, %v1446
    %v1449 = vmul.f32 %v1439, %v1447
    %1450 = vrot.lane.b32.xlu0 %v1264, 64
    %v1451 = vpop.permute.xlu0 %1450
    %v1454 = vsel %vm350, %v1448, 0
    %1456 = vmatprep.subr.mxu0 0.0
    %1457 = vmatpush1.msra.mxu0 %v1451
    %1458 = vmatprep.subr.mxu0 0.0
    %1459 = vmatpush1.msra.mxu0 0.0
    %1460 = vmatprep.subr.mxu0 0.0
    %1461 = vmatpush1.msra.mxu0 0.0
    %1462 = vmatprep.subr.mxu0 0.0
    %1463 = vmatpush1.msra.mxu0 0.0
    %1464 = vmatprep.subr.mxu0 0.0
    %1465 = vmatpush1.msra.mxu0 0.0
    %1466 = vmatprep.subr.mxu0 0.0
    %1467 = vmatpush1.msra.mxu0 0.0
    %1468 = vmatprep.subr.mxu0 0.0
    %1469 = vmatpush1.msra.mxu0 0.0
    %1470 = vmatprep.subr.mxu0 0.0
    %1471 = vmatpush1.msra.mxu0 0.0
    %1472 = vmatprep.subr.mxu0 0.0
    %1473 = vmatpush1.msra.mxu0 0.0
    %1474 = vmatprep.subr.mxu0 0.0
    %1475 = vmatpush1.msra.mxu0 0.0
    %1476 = vmatprep.subr.mxu0 0.0
    %1477 = vmatpush1.msra.mxu0 0.0
    %1478 = vmatprep.subr.mxu0 0.0
    %1479 = vmatpush1.msra.mxu0 0.0
    %1480 = vmatprep.subr.mxu0 0.0
    %1481 = vmatpush1.msra.mxu0 0.0
    %1482 = vmatprep.subr.mxu0 0.0
    %1483 = vmatpush1.msra.mxu0 0.0
    %1484 = vmatprep.subr.mxu0 0.0
    %1485 = vmatpush1.msra.mxu0 0.0
    %1486 = vmatprep.subr.mxu0 0.0
    %1487 = vmatpush1.msra.mxu0 0.0
    %1488 = vmatprep.subr.mxu0 0.0
    %1489 = vmatpush1.msra.mxu0 0.0
    %1490 = vmatprep.subr.mxu0 0.0
    %1491 = vmatpush1.msra.mxu0 0.0
    %1492 = vmatprep.subr.mxu0 0.0
    %1493 = vmatpush1.msra.mxu0 0.0
    %1494 = vmatprep.subr.mxu0 0.0
    %1495 = vmatpush1.msra.mxu0 0.0
    %1496 = vmatprep.subr.mxu0 0.0
    %1497 = vmatpush1.msra.mxu0 0.0
    %1498 = vmatprep.subr.mxu0 0.0
    %1499 = vmatpush1.msra.mxu0 0.0
    %1500 = vmatprep.subr.mxu0 0.0
    %1501 = vmatpush1.msra.mxu0 0.0
    %1502 = vmatprep.subr.mxu0 0.0
    %1503 = vmatpush1.msra.mxu0 0.0
    %1504 = vmatprep.subr.mxu0 0.0
    %1505 = vmatpush1.msra.mxu0 0.0
    %1506 = vmatprep.subr.mxu0 0.0
    %1507 = vmatpush1.msra.mxu0 0.0
    %1508 = vmatprep.subr.mxu0 0.0
    %1509 = vmatpush1.msra.mxu0 0.0
    %1510 = vmatprep.subr.mxu0 0.0
    %1511 = vmatpush1.msra.mxu0 0.0
    %1512 = vmatprep.subr.mxu0 0.0
    %1513 = vmatpush1.msra.mxu0 0.0
    %1514 = vmatprep.subr.mxu0 0.0
    %1515 = vmatpush1.msra.mxu0 0.0
    %1516 = vmatprep.subr.mxu0 0.0
    %1517 = vmatpush1.msra.mxu0 0.0
    %1518 = vmatprep.subr.mxu0 0.0
    %1519 = vmatpush1.msra.mxu0 0.0
    %1520 = vmatprep.mubr.f32.mxu0 0.0
    %1521 = vmatmul.mubr.f32.gmra.mrb[0].mxu0 %v1454
    %v1522 = vpop.f32.mrb[0].mxu0
    %v1523 = vadd.f32 0.0, %v1522
    %v1524 = vpop.f32.mrb[0].mxu0
    %1525 = vdwg.mxu0
    %1526 = vrot.lane.b32.xlu0 %v1267, 64
    %v1527 = vpop.permute.xlu0 %1526
    %v1530 = vsel %vm350, %v1449, 0
    %1532 = vmatprep.subr.mxu0 0.0
    %1533 = vmatpush1.msra.mxu0 %v1527
    %1534 = vmatprep.subr.mxu0 0.0
    %1535 = vmatpush1.msra.mxu0 0.0
    %1536 = vmatprep.subr.mxu0 0.0
    %1537 = vmatpush1.msra.mxu0 0.0
    %1538 = vmatprep.subr.mxu0 0.0
    %1539 = vmatpush1.msra.mxu0 0.0
    %1540 = vmatprep.subr.mxu0 0.0
    %1541 = vmatpush1.msra.mxu0 0.0
    %1542 = vmatprep.subr.mxu0 0.0
    %1543 = vmatpush1.msra.mxu0 0.0
    %1544 = vmatprep.subr.mxu0 0.0
    %1545 = vmatpush1.msra.mxu0 0.0
    %1546 = vmatprep.subr.mxu0 0.0
    %1547 = vmatpush1.msra.mxu0 0.0
    %1548 = vmatprep.subr.mxu0 0.0
    %1549 = vmatpush1.msra.mxu0 0.0
    %1550 = vmatprep.subr.mxu0 0.0
    %1551 = vmatpush1.msra.mxu0 0.0
    %1552 = vmatprep.subr.mxu0 0.0
    %1553 = vmatpush1.msra.mxu0 0.0
    %1554 = vmatprep.subr.mxu0 0.0
    %1555 = vmatpush1.msra.mxu0 0.0
    %1556 = vmatprep.subr.mxu0 0.0
    %1557 = vmatpush1.msra.mxu0 0.0
    %1558 = vmatprep.subr.mxu0 0.0
    %1559 = vmatpush1.msra.mxu0 0.0
    %1560 = vmatprep.subr.mxu0 0.0
    %1561 = vmatpush1.msra.mxu0 0.0
    %1562 = vmatprep.subr.mxu0 0.0
    %1563 = vmatpush1.msra.mxu0 0.0
    %1564 = vmatprep.subr.mxu0 0.0
    %1565 = vmatpush1.msra.mxu0 0.0
    %1566 = vmatprep.subr.mxu0 0.0
    %1567 = vmatpush1.msra.mxu0 0.0
    %1568 = vmatprep.subr.mxu0 0.0
    %1569 = vmatpush1.msra.mxu0 0.0
    %1570 = vmatprep.subr.mxu0 0.0
    %1571 = vmatpush1.msra.mxu0 0.0
    %1572 = vmatprep.subr.mxu0 0.0
    %1573 = vmatpush1.msra.mxu0 0.0
    %1574 = vmatprep.subr.mxu0 0.0
    %1575 = vmatpush1.msra.mxu0 0.0
    %1576 = vmatprep.subr.mxu0 0.0
    %1577 = vmatpush1.msra.mxu0 0.0
    %1578 = vmatprep.subr.mxu0 0.0
    %1579 = vmatpush1.msra.mxu0 0.0
    %1580 = vmatprep.subr.mxu0 0.0
    %1581 = vmatpush1.msra.mxu0 0.0
    %1582 = vmatprep.subr.mxu0 0.0
    %1583 = vmatpush1.msra.mxu0 0.0
    %1584 = vmatprep.subr.mxu0 0.0
    %1585 = vmatpush1.msra.mxu0 0.0
    %1586 = vmatprep.subr.mxu0 0.0
    %1587 = vmatpush1.msra.mxu0 0.0
    %1588 = vmatprep.subr.mxu0 0.0
    %1589 = vmatpush1.msra.mxu0 0.0
    %1590 = vmatprep.subr.mxu0 0.0
    %1591 = vmatpush1.msra.mxu0 0.0
    %1592 = vmatprep.subr.mxu0 0.0
    %1593 = vmatpush1.msra.mxu0 0.0
    %1594 = vmatprep.subr.mxu0 0.0
    %1595 = vmatpush1.msra.mxu0 0.0
    %1596 = vmatprep.mubr.f32.mxu0 0.0
    %1597 = vmatmul.mubr.f32.gmra.mrb[0].mxu0 %v1530
    %v1598 = vpop.f32.mrb[0].mxu0
    %v1599 = vadd.f32 0.0, %v1598
    %v1600 = vpop.f32.mrb[0].mxu0
    %1601 = vdwg.mxu0
    %1602 = vrot.lane.b32.xlu0 %v1264, 112
    %v1603 = vpop.permute.xlu0 %1602
    %1604 = vrot.lane.b32.xlu0 %v1264, 80
    %v1605 = vpop.permute.xlu0 %1604
    %v1606 = vsel %vm182, %v1603, 0
    %v1608 = vsel %vm182, %v1605, 0
    %1610 = vmatprep.subr.mxu0 0.0
    %1611 = vmatpush1.xpose.msra.mxu0 %v1608
    %1612 = vmatprep.subr.mxu0 0.0
    %1613 = vmatpush1.xpose.msra.mxu0 0.0
    %1614 = vmatprep.subr.mxu0 0.0
    %1615 = vmatpush1.xpose.msra.mxu0 0.0
    %1616 = vmatprep.subr.mxu0 0.0
    %1617 = vmatpush1.xpose.msra.mxu0 0.0
    %1618 = vmatprep.subr.mxu0 0.0
    %1619 = vmatpush1.xpose.msra.mxu0 0.0
    %1620 = vmatprep.subr.mxu0 0.0
    %1621 = vmatpush1.xpose.msra.mxu0 0.0
    %1622 = vmatprep.subr.mxu0 0.0
    %1623 = vmatpush1.xpose.msra.mxu0 0.0
    %1624 = vmatprep.subr.mxu0 0.0
    %1625 = vmatpush1.xpose.msra.mxu0 0.0
    %1626 = vmatprep.subr.mxu0 0.0
    %1627 = vmatpush1.xpose.msra.mxu0 0.0
    %1628 = vmatprep.subr.mxu0 0.0
    %1629 = vmatpush1.xpose.msra.mxu0 0.0
    %1630 = vmatprep.subr.mxu0 0.0
    %1631 = vmatpush1.xpose.msra.mxu0 0.0
    %1632 = vmatprep.subr.mxu0 0.0
    %1633 = vmatpush1.xpose.msra.mxu0 0.0
    %1634 = vmatprep.subr.mxu0 0.0
    %1635 = vmatpush1.xpose.msra.mxu0 0.0
    %1636 = vmatprep.subr.mxu0 0.0
    %1637 = vmatpush1.xpose.msra.mxu0 0.0
    %1638 = vmatprep.subr.mxu0 0.0
    %1639 = vmatpush1.xpose.msra.mxu0 0.0
    %1640 = vmatprep.subr.mxu0 0.0
    %1641 = vmatpush1.xpose.msra.mxu0 0.0
    %1642 = vmatprep.subr.mxu0 0.0
    %1643 = vmatpush1.xpose.msra.mxu0 0.0
    %1644 = vmatprep.subr.mxu0 0.0
    %1645 = vmatpush1.xpose.msra.mxu0 0.0
    %1646 = vmatprep.subr.mxu0 0.0
    %1647 = vmatpush1.xpose.msra.mxu0 0.0
    %1648 = vmatprep.subr.mxu0 0.0
    %1649 = vmatpush1.xpose.msra.mxu0 0.0
    %1650 = vmatprep.subr.mxu0 0.0
    %1651 = vmatpush1.xpose.msra.mxu0 0.0
    %1652 = vmatprep.subr.mxu0 0.0
    %1653 = vmatpush1.xpose.msra.mxu0 0.0
    %1654 = vmatprep.subr.mxu0 0.0
    %1655 = vmatpush1.xpose.msra.mxu0 0.0
    %1656 = vmatprep.subr.mxu0 0.0
    %1657 = vmatpush1.xpose.msra.mxu0 0.0
    %1658 = vmatprep.subr.mxu0 0.0
    %1659 = vmatpush1.xpose.msra.mxu0 0.0
    %1660 = vmatprep.subr.mxu0 0.0
    %1661 = vmatpush1.xpose.msra.mxu0 0.0
    %1662 = vmatprep.subr.mxu0 0.0
    %1663 = vmatpush1.xpose.msra.mxu0 0.0
    %1664 = vmatprep.subr.mxu0 0.0
    %1665 = vmatpush1.xpose.msra.mxu0 0.0
    %1666 = vmatprep.subr.mxu0 0.0
    %1667 = vmatpush1.xpose.msra.mxu0 0.0
    %1668 = vmatprep.subr.mxu0 0.0
    %1669 = vmatpush1.xpose.msra.mxu0 0.0
    %1670 = vmatprep.subr.mxu0 0.0
    %1671 = vmatpush1.xpose.msra.mxu0 0.0
    %1672 = vmatprep.subr.mxu0 0.0
    %1673 = vmatpush1.xpose.msra.mxu0 0.0
    %1674 = vmatprep.mubr.f32.mxu0 0.0
    %1675 = vmatmul.mubr.f32.gmra.mrb[0].mxu0 %v1606
    %v1676 = vpop.f32.mrb[0].mxu0
    %v1677 = vadd.f32 0.0, %v1676
    %v1678 = vpop.f32.mrb[0].mxu0
    %1679 = vdwg.mxu0
    %1680 = vrot.lane.b32.xlu0 %v1267, 112
    %v1681 = vpop.permute.xlu0 %1680
    %1682 = vrot.lane.b32.xlu0 %v1267, 80
    %v1683 = vpop.permute.xlu0 %1682
    %v1684 = vsel %vm182, %v1681, 0
    %v1686 = vsel %vm182, %v1683, 0
    %1688 = vmatprep.subr.mxu0 0.0
    %1689 = vmatpush1.xpose.msra.mxu0 %v1686
    %1690 = vmatprep.subr.mxu0 0.0
    %1691 = vmatpush1.xpose.msra.mxu0 0.0
    %1692 = vmatprep.subr.mxu0 0.0
    %1693 = vmatpush1.xpose.msra.mxu0 0.0
    %1694 = vmatprep.subr.mxu0 0.0
    %1695 = vmatpush1.xpose.msra.mxu0 0.0
    %1696 = vmatprep.subr.mxu0 0.0
    %1697 = vmatpush1.xpose.msra.mxu0 0.0
    %1698 = vmatprep.subr.mxu0 0.0
    %1699 = vmatpush1.xpose.msra.mxu0 0.0
    %1700 = vmatprep.subr.mxu0 0.0
    %1701 = vmatpush1.xpose.msra.mxu0 0.0
    %1702 = vmatprep.subr.mxu0 0.0
    %1703 = vmatpush1.xpose.msra.mxu0 0.0
    %1704 = vmatprep.subr.mxu0 0.0
    %1705 = vmatpush1.xpose.msra.mxu0 0.0
    %1706 = vmatprep.subr.mxu0 0.0
    %1707 = vmatpush1.xpose.msra.mxu0 0.0
    %1708 = vmatprep.subr.mxu0 0.0
    %1709 = vmatpush1.xpose.msra.mxu0 0.0
    %1710 = vmatprep.subr.mxu0 0.0
    %1711 = vmatpush1.xpose.msra.mxu0 0.0
    %1712 = vmatprep.subr.mxu0 0.0
    %1713 = vmatpush1.xpose.msra.mxu0 0.0
    %1714 = vmatprep.subr.mxu0 0.0
    %1715 = vmatpush1.xpose.msra.mxu0 0.0
    %1716 = vmatprep.subr.mxu0 0.0
    %1717 = vmatpush1.xpose.msra.mxu0 0.0
    %1718 = vmatprep.subr.mxu0 0.0
    %1719 = vmatpush1.xpose.msra.mxu0 0.0
    %1720 = vmatprep.subr.mxu0 0.0
    %1721 = vmatpush1.xpose.msra.mxu0 0.0
    %1722 = vmatprep.subr.mxu0 0.0
    %1723 = vmatpush1.xpose.msra.mxu0 0.0
    %1724 = vmatprep.subr.mxu0 0.0
    %1725 = vmatpush1.xpose.msra.mxu0 0.0
    %1726 = vmatprep.subr.mxu0 0.0
    %1727 = vmatpush1.xpose.msra.mxu0 0.0
    %1728 = vmatprep.subr.mxu0 0.0
    %1729 = vmatpush1.xpose.msra.mxu0 0.0
    %1730 = vmatprep.subr.mxu0 0.0
    %1731 = vmatpush1.xpose.msra.mxu0 0.0
    %1732 = vmatprep.subr.mxu0 0.0
    %1733 = vmatpush1.xpose.msra.mxu0 0.0
    %1734 = vmatprep.subr.mxu0 0.0
    %1735 = vmatpush1.xpose.msra.mxu0 0.0
    %1736 = vmatprep.subr.mxu0 0.0
    %1737 = vmatpush1.xpose.msra.mxu0 0.0
    %1738 = vmatprep.subr.mxu0 0.0
    %1739 = vmatpush1.xpose.msra.mxu0 0.0
    %1740 = vmatprep.subr.mxu0 0.0
    %1741 = vmatpush1.xpose.msra.mxu0 0.0
    %1742 = vmatprep.subr.mxu0 0.0
    %1743 = vmatpush1.xpose.msra.mxu0 0.0
    %1744 = vmatprep.subr.mxu0 0.0
    %1745 = vmatpush1.xpose.msra.mxu0 0.0
    %1746 = vmatprep.subr.mxu0 0.0
    %1747 = vmatpush1.xpose.msra.mxu0 0.0
    %1748 = vmatprep.subr.mxu0 0.0
    %1749 = vmatpush1.xpose.msra.mxu0 0.0
    %1750 = vmatprep.subr.mxu0 0.0
    %1751 = vmatpush1.xpose.msra.mxu0 0.0
    %1752 = vmatprep.mubr.f32.mxu0 0.0
    %1753 = vmatmul.mubr.f32.gmra.mrb[0].mxu0 %v1684
    %v1754 = vpop.f32.mrb[0].mxu0
    %v1755 = vadd.f32 0.0, %v1754
    %v1756 = vpop.f32.mrb[0].mxu0
    %1757 = vdwg.mxu0
    %v1758 = vmul.f32 %v1677, 0.25
    %v1759 = vmul.f32 %v1755, 0.25
    %v1760 = vadd.f32 %v1758, %v341
    %v1761 = vadd.f32 %v1759, %v345
    %v1762 = vsel %vm350, %v1760, -inf
    %1763 = vmax.xlane.f32.xlu0 %v1762
    %v1764 = vpop.xlane.xlu0 %1763
    %v1765 = vsel %vm350, %v1761, -inf
    %1766 = vmax.xlane.f32.xlu0 %v1765
    %v1767 = vpop.xlane.xlu0 %1766
    %v1768 = vsub.f32 %v1760, %v1764
    %v1769 = vsub.f32 %v1761, %v1767
    %v1770 = vmul.f32 %v1768, 1.442695
    %v1771 = vpow.pop %v1770
    %v1772 = vmul.f32 %v1769, 1.442695
    %v1773 = vpow.pop %v1772
    %v1774 = vsel %vm350, %v1771, 0.0
    %1775 = vadd.xlane.f32.xlu0 %v1774
    %v1776 = vpop.xlane.xlu0 %1775
    %v1777 = vsel %vm350, %v1773, 0.0
    %1778 = vadd.xlane.f32.xlu0 %v1777
    %v1779 = vpop.xlane.xlu0 %1778
    %v1780 = vrcp.pop %v1776
    %v1781 = vrcp.pop %v1779
    %v1782 = vmul.f32 %v1771, %v1780
    %v1783 = vmul.f32 %v1773, %v1781
    %1784 = vrot.lane.b32.xlu0 %v1264, 48
    %v1785 = vpop.permute.xlu0 %1784
    %v1788 = vsel %vm350, %v1782, 0
    %1790 = vmatprep.subr.mxu0 0.0
    %1791 = vmatpush1.msra.mxu0 %v1785
    %1792 = vmatprep.subr.mxu0 0.0
    %1793 = vmatpush1.msra.mxu0 0.0
    %1794 = vmatprep.subr.mxu0 0.0
    %1795 = vmatpush1.msra.mxu0 0.0
    %1796 = vmatprep.subr.mxu0 0.0
    %1797 = vmatpush1.msra.mxu0 0.0
    %1798 = vmatprep.subr.mxu0 0.0
    %1799 = vmatpush1.msra.mxu0 0.0
    %1800 = vmatprep.subr.mxu0 0.0
    %1801 = vmatpush1.msra.mxu0 0.0
    %1802 = vmatprep.subr.mxu0 0.0
    %1803 = vmatpush1.msra.mxu0 0.0
    %1804 = vmatprep.subr.mxu0 0.0
    %1805 = vmatpush1.msra.mxu0 0.0
    %1806 = vmatprep.subr.mxu0 0.0
    %1807 = vmatpush1.msra.mxu0 0.0
    %1808 = vmatprep.subr.mxu0 0.0
    %1809 = vmatpush1.msra.mxu0 0.0
    %1810 = vmatprep.subr.mxu0 0.0
    %1811 = vmatpush1.msra.mxu0 0.0
    %1812 = vmatprep.subr.mxu0 0.0
    %1813 = vmatpush1.msra.mxu0 0.0
    %1814 = vmatprep.subr.mxu0 0.0
    %1815 = vmatpush1.msra.mxu0 0.0
    %1816 = vmatprep.subr.mxu0 0.0
    %1817 = vmatpush1.msra.mxu0 0.0
    %1818 = vmatprep.subr.mxu0 0.0
    %1819 = vmatpush1.msra.mxu0 0.0
    %1820 = vmatprep.subr.mxu0 0.0
    %1821 = vmatpush1.msra.mxu0 0.0
    %1822 = vmatprep.subr.mxu0 0.0
    %1823 = vmatpush1.msra.mxu0 0.0
    %1824 = vmatprep.subr.mxu0 0.0
    %1825 = vmatpush1.msra.mxu0 0.0
    %1826 = vmatprep.subr.mxu0 0.0
    %1827 = vmatpush1.msra.mxu0 0.0
    %1828 = vmatprep.subr.mxu0 0.0
    %1829 = vmatpush1.msra.mxu0 0.0
    %1830 = vmatprep.subr.mxu0 0.0
    %1831 = vmatpush1.msra.mxu0 0.0
    %1832 = vmatprep.subr.mxu0 0.0
    %1833 = vmatpush1.msra.mxu0 0.0
    %1834 = vmatprep.subr.mxu0 0.0
    %1835 = vmatpush1.msra.mxu0 0.0
    %1836 = vmatprep.subr.mxu0 0.0
    %1837 = vmatpush1.msra.mxu0 0.0
    %1838 = vmatprep.subr.mxu0 0.0
    %1839 = vmatpush1.msra.mxu0 0.0
    %1840 = vmatprep.subr.mxu0 0.0
    %1841 = vmatpush1.msra.mxu0 0.0
    %1842 = vmatprep.subr.mxu0 0.0
    %1843 = vmatpush1.msra.mxu0 0.0
    %1844 = vmatprep.subr.mxu0 0.0
    %1845 = vmatpush1.msra.mxu0 0.0
    %1846 = vmatprep.subr.mxu0 0.0
    %1847 = vmatpush1.msra.mxu0 0.0
    %1848 = vmatprep.subr.mxu0 0.0
    %1849 = vmatpush1.msra.mxu0 0.0
    %1850 = vmatprep.subr.mxu0 0.0
    %1851 = vmatpush1.msra.mxu0 0.0
    %1852 = vmatprep.subr.mxu0 0.0
    %1853 = vmatpush1.msra.mxu0 0.0
    %1854 = vmatprep.mubr.f32.mxu0 0.0
    %1855 = vmatmul.mubr.f32.gmra.mrb[0].mxu0 %v1788
    %v1856 = vpop.f32.mrb[0].mxu0
    %v1857 = vadd.f32 0.0, %v1856
    %v1858 = vpop.f32.mrb[0].mxu0
    %1859 = vdwg.mxu0
    %1860 = vrot.lane.b32.xlu0 %v1267, 48
    %v1861 = vpop.permute.xlu0 %1860
    %v1864 = vsel %vm350, %v1783, 0
    %1866 = vmatprep.subr.mxu0 0.0
    %1867 = vmatpush1.msra.mxu0 %v1861
    %1868 = vmatprep.subr.mxu0 0.0
    %1869 = vmatpush1.msra.mxu0 0.0
    %1870 = vmatprep.subr.mxu0 0.0
    %1871 = vmatpush1.msra.mxu0 0.0
    %1872 = vmatprep.subr.mxu0 0.0
    %1873 = vmatpush1.msra.mxu0 0.0
    %1874 = vmatprep.subr.mxu0 0.0
    %1875 = vmatpush1.msra.mxu0 0.0
    %1876 = vmatprep.subr.mxu0 0.0
    %1877 = vmatpush1.msra.mxu0 0.0
    %1878 = vmatprep.subr.mxu0 0.0
    %1879 = vmatpush1.msra.mxu0 0.0
    %1880 = vmatprep.subr.mxu0 0.0
    %1881 = vmatpush1.msra.mxu0 0.0
    %1882 = vmatprep.subr.mxu0 0.0
    %1883 = vmatpush1.msra.mxu0 0.0
    %1884 = vmatprep.subr.mxu0 0.0
    %1885 = vmatpush1.msra.mxu0 0.0
    %1886 = vmatprep.subr.mxu0 0.0
    %1887 = vmatpush1.msra.mxu0 0.0
    %1888 = vmatprep.subr.mxu0 0.0
    %1889 = vmatpush1.msra.mxu0 0.0
    %1890 = vmatprep.subr.mxu0 0.0
    %1891 = vmatpush1.msra.mxu0 0.0
    %1892 = vmatprep.subr.mxu0 0.0
    %1893 = vmatpush1.msra.mxu0 0.0
    %1894 = vmatprep.subr.mxu0 0.0
    %1895 = vmatpush1.msra.mxu0 0.0
    %1896 = vmatprep.subr.mxu0 0.0
    %1897 = vmatpush1.msra.mxu0 0.0
    %1898 = vmatprep.subr.mxu0 0.0
    %1899 = vmatpush1.msra.mxu0 0.0
    %1900 = vmatprep.subr.mxu0 0.0
    %1901 = vmatpush1.msra.mxu0 0.0
    %1902 = vmatprep.subr.mxu0 0.0
    %1903 = vmatpush1.msra.mxu0 0.0
    %1904 = vmatprep.subr.mxu0 0.0
    %1905 = vmatpush1.msra.mxu0 0.0
    %1906 = vmatprep.subr.mxu0 0.0
    %1907 = vmatpush1.msra.mxu0 0.0
    %1908 = vmatprep.subr.mxu0 0.0
    %1909 = vmatpush1.msra.mxu0 0.0
    %1910 = vmatprep.subr.mxu0 0.0
    %1911 = vmatpush1.msra.mxu0 0.0
    %1912 = vmatprep.subr.mxu0 0.0
    %1913 = vmatpush1.msra.mxu0 0.0
    %1914 = vmatprep.subr.mxu0 0.0
    %1915 = vmatpush1.msra.mxu0 0.0
    %1916 = vmatprep.subr.mxu0 0.0
    %1917 = vmatpush1.msra.mxu0 0.0
    %1918 = vmatprep.subr.mxu0 0.0
    %1919 = vmatpush1.msra.mxu0 0.0
    %1920 = vmatprep.subr.mxu0 0.0
    %1921 = vmatpush1.msra.mxu0 0.0
    %1922 = vmatprep.subr.mxu0 0.0
    %1923 = vmatpush1.msra.mxu0 0.0
    %1924 = vmatprep.subr.mxu0 0.0
    %1925 = vmatpush1.msra.mxu0 0.0
    %1926 = vmatprep.subr.mxu0 0.0
    %1927 = vmatpush1.msra.mxu0 0.0
    %1928 = vmatprep.subr.mxu0 0.0
    %1929 = vmatpush1.msra.mxu0 0.0
    %1930 = vmatprep.mubr.f32.mxu0 0.0
    %1931 = vmatmul.mubr.f32.gmra.mrb[0].mxu0 %v1864
    %v1932 = vpop.f32.mrb[0].mxu0
    %v1933 = vadd.f32 0.0, %v1932
    %v1934 = vpop.f32.mrb[0].mxu0
    %1935 = vdwg.mxu0
    %1938 = vrot.lane.b32.xlu0 %v1857, 16
    %v1939 = vpop.permute.xlu0 %1938
    %1940 = vrot.lane.b32.xlu0 %v1933, 16
    %v1941 = vpop.permute.xlu0 %1940
    %v1944 = vsel %vm182, %v1523, %v1939
    %v1945 = vsel %vm182, %v1599, %v1941
    %s1946 = scalar_lea.vmem %s6, 16
    %v1947 = vld [vmem:[%s1946] sm:$0xf]
    %v1948 = vld [vmem:[%s1946 + $0x4] sm:$0xf]
    %v1949 = vld [vmem:[%s1946 + $0x8] sm:$0xf]
    %v1950 = vld [vmem:[%s1946 + $0xc] sm:$0xf]
    %v1951 = vpack.c.bf16 %v1945, %v1944
    %s1952 = scalar_lea.vmem %s7, 1
    %v1953 = vld [vmem:[%s1952] sm:$0x1]
    %v1955 = vlaneseq
    %v1956 = vshrl.u32 %v1955, 7
    %v1957 = vsub.s32 0, %v1956
    %v1958 = vrot.slane %v1953, %v1957
    %v1964 = vunpack.c.l.b16 %v1947
    %v1965 = vunpack.c.l.b16 %v1948
    %v1966 = vunpack.c.l.b16 %v1949
    %v1967 = vunpack.c.l.b16 %v1950
    %v1968 = vpack.c.b16 %v1965, %v1964
    %v1969 = vpack.c.b16 %v1967, %v1966
    %v1973 = vsel %vm65, %v1951, 0
    %1975 = vmatprep.subr.bf16.mxu0 0
    %1976 = vmatpush1.bf16.msra.mxu0 %v1968
    %1977 = vmatprep.subr.bf16.mxu0 0
    %1978 = vmatpush1.bf16.msra.mxu0 %v1969
    %1979 = vmatprep.subr.bf16.mxu0 0
    %1980 = vmatpush1.bf16.msra.mxu0 0
    %1981 = vmatprep.subr.bf16.mxu0 0
    %1982 = vmatpush1.bf16.msra.mxu0 0
    %1983 = vmatprep.subr.bf16.mxu0 0
    %1984 = vmatpush1.bf16.msra.mxu0 0
    %1985 = vmatprep.subr.bf16.mxu0 0
    %1986 = vmatpush1.bf16.msra.mxu0 0
    %1987 = vmatprep.subr.bf16.mxu0 0
    %1988 = vmatpush1.bf16.msra.mxu0 0
    %1989 = vmatprep.subr.bf16.mxu0 0
    %1990 = vmatpush1.bf16.msra.mxu0 0
    %1991 = vmatprep.subr.bf16.mxu0 0
    %1992 = vmatpush1.bf16.msra.mxu0 0
    %1993 = vmatprep.subr.bf16.mxu0 0
    %1994 = vmatpush1.bf16.msra.mxu0 0
    %1995 = vmatprep.subr.bf16.mxu0 0
    %1996 = vmatpush1.bf16.msra.mxu0 0
    %1997 = vmatprep.subr.bf16.mxu0 0
    %1998 = vmatpush1.bf16.msra.mxu0 0
    %1999 = vmatprep.subr.bf16.mxu0 0
    %2000 = vmatpush1.bf16.msra.mxu0 0
    %2001 = vmatprep.subr.bf16.mxu0 0
    %2002 = vmatpush1.bf16.msra.mxu0 0
    %2003 = vmatprep.subr.bf16.mxu0 0
    %2004 = vmatpush1.bf16.msra.mxu0 0
    %2005 = vmatprep.subr.bf16.mxu0 0
    %2006 = vmatpush1.bf16.msra.mxu0 0
    %2007 = vmatprep.mubr.bf16.mxu0 0
    %2008 = vmatmul.mubr.bf16.gmra.mrb[0].mxu0 %v1973
    %v2009 = vpop.f32.mrb[0].mxu0
    %v2010 = vadd.f32 %v1958, %v2009
    %v2011 = vpop.f32.mrb[0].mxu0
    %v2012 = vpop.f32.mrb[0].mxu0
    %v2013 = vadd.f32 %v1958, %v2012
    %v2014 = vpop.f32.mrb[0].mxu0
    %2015 = vdwg.mxu0
    %v2016 = vadd.f32 %v2010, %v1198
    %v2017 = vadd.f32 %v2013, %v1199
    %s2018 = scalar_lea.vmem %s8, 1
    %v2019 = vld [vmem:[%s2018] sm:$0x1]
    %s2020 = scalar_lea.vmem %s9, 1
    %v2021 = vld [vmem:[%s2020] sm:$0x1]
    %v2022 = vsel %vm65, %v2016, 0.0
    %2023 = vadd.xlane.f32.xlu0 %v2022
    %v2024 = vpop.xlane.xlu0 %2023
    %v2025 = vsel %vm65, %v2017, 0.0
    %2026 = vadd.xlane.f32.xlu0 %v2025
    %v2027 = vpop.xlane.xlu0 %2026
    %v2028 = vmul.f32 %v2024, %v72
    %v2029 = vmul.f32 %v2027, %v72
    %v2030 = vsub.f32 %v2016, %v2028
    %v2031 = vsub.f32 %v2017, %v2029
    %v2032 = vmul.f32 %v2030, %v2030
    %v2033 = vmul.f32 %v2031, %v2031
    %v2034 = vsel %vm65, %v2032, 0.0
    %2035 = vadd.xlane.f32.xlu0 %v2034
    %v2036 = vpop.xlane.xlu0 %2035
    %v2037 = vsel %vm65, %v2033, 0.0
    %2038 = vadd.xlane.f32.xlu0 %v2037
    %v2039 = vpop.xlane.xlu0 %2038
    %v2040 = vmul.f32 %v2036, %v72
    %v2041 = vmul.f32 %v2039, %v72
    %v2042 = vadd.f32 %v2040, 1e-12
    %v2043 = vadd.f32 %v2041, 1e-12
    %v2044 = vrsqrt.pop %v2042
    %v2045 = vrsqrt.pop %v2043
    %v2046 = vmul.f32 %v2030, %v2044
    %v2047 = vmul.f32 %v2031, %v2045
    %v2049 = vlaneseq
    %v2050 = vshrl.u32 %v2049, 7
    %v2051 = vsub.s32 0, %v2050
    %v2052 = vrot.slane %v2019, %v2051
    %v2054 = vmul.f32 %v2046, %v2052
    %v2055 = vmul.f32 %v2047, %v2052
    %v2057 = vlaneseq
    %v2058 = vshrl.u32 %v2057, 7
    %v2059 = vsub.s32 0, %v2058
    %v2060 = vrot.slane %v2021, %v2059
    %v2062 = vadd.f32 %v2054, %v2060
    %v2063 = vadd.f32 %v2055, %v2060
    %s2064 = scalar_lea.vmem %s10, 16
    %v2065 = vld [vmem:[%s2064] sm:$0xf]
    %v2066 = vld [vmem:[%s2064 + $0x4] sm:$0xf]
    %v2067 = vld [vmem:[%s2064 + $0x8] sm:$0xf]
    %v2068 = vld [vmem:[%s2064 + $0xc] sm:$0xf]
    %v2069 = vpack.c.bf16 %v2063, %v2062
    %s2070 = scalar_lea.vmem %s11, 1
    %v2071 = vld [vmem:[%s2070] sm:$0x1]
    %v2073 = vlaneseq
    %v2074 = vshrl.u32 %v2073, 7
    %v2075 = vsub.s32 0, %v2074
    %v2076 = vrot.slane %v2071, %v2075
    %v2082 = vunpack.c.l.b16 %v2065
    %v2083 = vunpack.c.l.b16 %v2066
    %v2084 = vunpack.c.l.b16 %v2067
    %v2085 = vunpack.c.l.b16 %v2068
    %v2086 = vpack.c.b16 %v2083, %v2082
    %v2087 = vpack.c.b16 %v2085, %v2084
    %v2091 = vsel %vm65, %v2069, 0
    %2093 = vmatprep.subr.bf16.mxu0 0
    %2094 = vmatpush1.bf16.msra.mxu0 %v2086
    %2095 = vmatprep.subr.bf16.mxu0 0
    %2096 = vmatpush1.bf16.msra.mxu0 %v2087
    %2097 = vmatprep.subr.bf16.mxu0 0
    %2098 = vmatpush1.bf16.msra.mxu0 0
    %2099 = vmatprep.subr.bf16.mxu0 0
    %2100 = vmatpush1.bf16.msra.mxu0 0
    %2101 = vmatprep.subr.bf16.mxu0 0
    %2102 = vmatpush1.bf16.msra.mxu0 0
    %2103 = vmatprep.subr.bf16.mxu0 0
    %2104 = vmatpush1.bf16.msra.mxu0 0
    %2105 = vmatprep.subr.bf16.mxu0 0
    %2106 = vmatpush1.bf16.msra.mxu0 0
    %2107 = vmatprep.subr.bf16.mxu0 0
    %2108 = vmatpush1.bf16.msra.mxu0 0
    %2109 = vmatprep.subr.bf16.mxu0 0
    %2110 = vmatpush1.bf16.msra.mxu0 0
    %2111 = vmatprep.subr.bf16.mxu0 0
    %2112 = vmatpush1.bf16.msra.mxu0 0
    %2113 = vmatprep.subr.bf16.mxu0 0
    %2114 = vmatpush1.bf16.msra.mxu0 0
    %2115 = vmatprep.subr.bf16.mxu0 0
    %2116 = vmatpush1.bf16.msra.mxu0 0
    %2117 = vmatprep.subr.bf16.mxu0 0
    %2118 = vmatpush1.bf16.msra.mxu0 0
    %2119 = vmatprep.subr.bf16.mxu0 0
    %2120 = vmatpush1.bf16.msra.mxu0 0
    %2121 = vmatprep.subr.bf16.mxu0 0
    %2122 = vmatpush1.bf16.msra.mxu0 0
    %2123 = vmatprep.subr.bf16.mxu0 0
    %2124 = vmatpush1.bf16.msra.mxu0 0
    %2125 = vmatprep.mubr.bf16.mxu0 0
    %2126 = vmatmul.mubr.bf16.gmra.mrb[0].mxu0 %v2091
    %v2127 = vpop.f32.mrb[0].mxu0
    %v2128 = vadd.f32 %v2076, %v2127
    %v2129 = vpop.f32.mrb[0].mxu0
    %v2130 = vpop.f32.mrb[0].mxu0
    %v2131 = vadd.f32 %v2076, %v2130
    %v2132 = vpop.f32.mrb[0].mxu0
    %2133 = vdwg.mxu0
    %v2134 = vmul.f32 %v2128, %v2128
    %v2135 = vmul.f32 %v2131, %v2131
    %v2136 = vmul.f32 %v2128, %v2134
    %v2137 = vmul.f32 %v2131, %v2135
    %v2138 = vmul.f32 %v2136, 0.044715
    %v2139 = vmul.f32 %v2137, 0.044715
    %v2140 = vadd.f32 %v2128, %v2138
    %v2141 = vadd.f32 %v2131, %v2139
    %v2142 = vmul.f32 %v2140, 0.7978846
    %v2143 = vmul.f32 %v2141, 0.7978846
    %v2144 = vtanh.pop %v2142
    %v2145 = vtanh.pop %v2143
    %v2146 = vadd.f32 %v2144, 1.0
    %v2147 = vadd.f32 %v2145, 1.0
    %v2148 = vmul.f32 %v2146, 0.5
    %v2149 = vmul.f32 %v2147, 0.5
    %v2150 = vmul.f32 %v2128, %v2148
    %v2151 = vmul.f32 %v2131, %v2149
    %s2152 = scalar_lea.vmem %s12, 32
    %v2153 = vld [vmem:[%s2152] sm:$0xf]
    %v2154 = vld [vmem:[%s2152 + $0x4] sm:$0xf]
    %v2155 = vld [vmem:[%s2152 + $0x8] sm:$0xf]
    %v2156 = vld [vmem:[%s2152 + $0xc] sm:$0xf]
    %v2157 = vld [vmem:[%s2152 + $0x10] sm:$0xf]
    %v2158 = vld [vmem:[%s2152 + $0x14] sm:$0xf]
    %v2159 = vld [vmem:[%s2152 + $0x18] sm:$0xf]
    %v2160 = vld [vmem:[%s2152 + $0x1c] sm:$0xf]
    %v2161 = vpack.c.bf16 %v2151, %v2150
    %s2162 = scalar_lea.vmem %s13, 1
    %v2163 = vld [vmem:[%s2162] sm:$0x1]
    %v2165 = vlaneseq
    %v2166 = vshrl.u32 %v2165, 7
    %v2167 = vsub.s32 0, %v2166
    %v2168 = vrot.slane %v2163, %v2167
    %v2178 = vunpack.c.l.b16 %v2153
    %v2179 = vunpack.c.l.b16 %v2154
    %v2180 = vunpack.c.l.b16 %v2155
    %v2181 = vunpack.c.l.b16 %v2156
    %v2182 = vunpack.c.l.b16 %v2157
    %v2183 = vunpack.c.l.b16 %v2158
    %v2184 = vunpack.c.l.b16 %v2159
    %v2185 = vunpack.c.l.b16 %v2160
    %v2186 = vpack.c.b16 %v2179, %v2178
    %v2187 = vpack.c.b16 %v2181, %v2180
    %v2188 = vpack.c.b16 %v2183, %v2182
    %v2189 = vpack.c.b16 %v2185, %v2184
    %v2195 = vsel %vm1109, %v2161, 0
    %2197 = vmatprep.subr.bf16.mxu0 0
    %2198 = vmatpush1.bf16.msra.mxu0 %v2186
    %2199 = vmatprep.subr.bf16.mxu0 0
    %2200 = vmatpush1.bf16.msra.mxu0 %v2187
    %2201 = vmatprep.subr.bf16.mxu0 0
    %2202 = vmatpush1.bf16.msra.mxu0 %v2188
    %2203 = vmatprep.subr.bf16.mxu0 0
    %2204 = vmatpush1.bf16.msra.mxu0 %v2189
    %2205 = vmatprep.subr.bf16.mxu0 0
    %2206 = vmatpush1.bf16.msra.mxu0 0
    %2207 = vmatprep.subr.bf16.mxu0 0
    %2208 = vmatpush1.bf16.msra.mxu0 0
    %2209 = vmatprep.subr.bf16.mxu0 0
    %2210 = vmatpush1.bf16.msra.mxu0 0
    %2211 = vmatprep.subr.bf16.mxu0 0
    %2212 = vmatpush1.bf16.msra.mxu0 0
    %2213 = vmatprep.subr.bf16.mxu0 0
    %2214 = vmatpush1.bf16.msra.mxu0 0
    %2215 = vmatprep.subr.bf16.mxu0 0
    %2216 = vmatpush1.bf16.msra.mxu0 0
    %2217 = vmatprep.subr.bf16.mxu0 0
    %2218 = vmatpush1.bf16.msra.mxu0 0
    %2219 = vmatprep.subr.bf16.mxu0 0
    %2220 = vmatpush1.bf16.msra.mxu0 0
    %2221 = vmatprep.subr.bf16.mxu0 0
    %2222 = vmatpush1.bf16.msra.mxu0 0
    %2223 = vmatprep.subr.bf16.mxu0 0
    %2224 = vmatpush1.bf16.msra.mxu0 0
    %2225 = vmatprep.subr.bf16.mxu0 0
    %2226 = vmatpush1.bf16.msra.mxu0 0
    %2227 = vmatprep.subr.bf16.mxu0 0
    %2228 = vmatpush1.bf16.msra.mxu0 0
    %2229 = vmatprep.mubr.bf16.mxu0 0
    %2230 = vmatmul.mubr.bf16.gmra.mrb[0].mxu0 %v2195
    %v2231 = vpop.f32.mrb[0].mxu0
    %v2232 = vadd.f32 %v2168, %v2231
    %v2233 = vpop.f32.mrb[0].mxu0
    %v2234 = vpop.f32.mrb[0].mxu0
    %v2235 = vadd.f32 %v2168, %v2234
    %v2236 = vpop.f32.mrb[0].mxu0
    %2237 = vdwg.mxu0
    %v2238 = vadd.f32 %v2232, %v2062
    %v2239 = vadd.f32 %v2235, %v2063
    %s2240 = scalar_lea.vmem %s14, 1
    %v2241 = vld [vmem:[%s2240] sm:$0x1]
    %s2242 = scalar_lea.vmem %s15, 1
    %v2243 = vld [vmem:[%s2242] sm:$0x1]
    %v2244 = vsel %vm65, %v2238, 0.0
    %2245 = vadd.xlane.f32.xlu0 %v2244
    %v2246 = vpop.xlane.xlu0 %2245
    %v2247 = vsel %vm65, %v2239, 0.0
    %2248 = vadd.xlane.f32.xlu0 %v2247
    %v2249 = vpop.xlane.xlu0 %2248
    %v2250 = vmul.f32 %v2246, %v72
    %v2251 = vmul.f32 %v2249, %v72
    %v2252 = vsub.f32 %v2238, %v2250
    %v2253 = vsub.f32 %v2239, %v2251
    %v2254 = vmul.f32 %v2252, %v2252
    %v2255 = vmul.f32 %v2253, %v2253
    %v2256 = vsel %vm65, %v2254, 0.0
    %2257 = vadd.xlane.f32.xlu0 %v2256
    %v2258 = vpop.xlane.xlu0 %2257
    %v2259 = vsel %vm65, %v2255, 0.0
    %2260 = vadd.xlane.f32.xlu0 %v2259
    %v2261 = vpop.xlane.xlu0 %2260
    %v2262 = vmul.f32 %v2258, %v72
    %v2263 = vmul.f32 %v2261, %v72
    %v2264 = vadd.f32 %v2262, 1e-12
    %v2265 = vadd.f32 %v2263, 1e-12
    %v2266 = vrsqrt.pop %v2264
    %v2267 = vrsqrt.pop %v2265
    %v2268 = vmul.f32 %v2252, %v2266
    %v2269 = vmul.f32 %v2253, %v2267
    %v2271 = vlaneseq
    %v2272 = vshrl.u32 %v2271, 7
    %v2273 = vsub.s32 0, %v2272
    %v2274 = vrot.slane %v2241, %v2273
    %v2276 = vmul.f32 %v2268, %v2274
    %v2277 = vmul.f32 %v2269, %v2274
    %v2279 = vlaneseq
    %v2280 = vshrl.u32 %v2279, 7
    %v2281 = vsub.s32 0, %v2280
    %v2282 = vrot.slane %v2243, %v2281
    %v2284 = vadd.f32 %v2276, %v2282
    %v2285 = vadd.f32 %v2277, %v2282
    %v2286 = vld [vmem:[%s16] sm:$0xf]
    %v2287 = vld [vmem:[%s16 + $0x4] sm:$0xf]
    %v2288 = vld [vmem:[%s16 + $0x8] sm:$0xf]
    %v2289 = vld [vmem:[%s16 + $0xc] sm:$0xf]
    %v2290 = vpack.c.bf16 %v2284, %v2284
    %v2291 = vpack.c.bf16 %v2285, %v2285
    %v2292 = vld [vmem:[%s17] sm:$0x1]
    %v2294 = vlaneseq
    %v2295 = vshrl.u32 %v2294, 7
    %v2296 = vsub.s32 0, %v2295
    %v2297 = vrot.slane %v2292, %v2296
    %v2301 = vunpack.c.l.b16 %v2290
    %v2302 = vunpack.c.l.b16 %v2291
    %v2303 = vrot.slane %v2302, 7
    %vm2304 = vcmask 1041409
    %v2305 = vsel %vm2304, %v2303, %v2301
    %v2306 = vpack.c.b16 %v2305, %v2305
    %v2311 = vunpack.c.l.b16 %v2286
    %v2312 = vunpack.c.l.b16 %v2287
    %v2313 = vunpack.c.l.b16 %v2288
    %v2314 = vunpack.c.l.b16 %v2289
    %v2315 = vpack.c.b16 %v2312, %v2311
    %v2316 = vpack.c.b16 %v2314, %v2313
    %v2320 = vsel %vm65, %v2306, 0
    %2322 = vmatprep.subr.bf16.mxu0 0
    %2323 = vmatpush1.bf16.msra.mxu0 %v2315
    %2324 = vmatprep.subr.bf16.mxu0 0
    %2325 = vmatpush1.bf16.msra.mxu0 %v2316
    %2326 = vmatprep.subr.bf16.mxu0 0
    %2327 = vmatpush1.bf16.msra.mxu0 0
    %2328 = vmatprep.subr.bf16.mxu0 0
    %2329 = vmatpush1.bf16.msra.mxu0 0
    %2330 = vmatprep.subr.bf16.mxu0 0
    %2331 = vmatpush1.bf16.msra.mxu0 0
    %2332 = vmatprep.subr.bf16.mxu0 0
    %2333 = vmatpush1.bf16.msra.mxu0 0
    %2334 = vmatprep.subr.bf16.mxu0 0
    %2335 = vmatpush1.bf16.msra.mxu0 0
    %2336 = vmatprep.subr.bf16.mxu0 0
    %2337 = vmatpush1.bf16.msra.mxu0 0
    %2338 = vmatprep.subr.bf16.mxu0 0
    %2339 = vmatpush1.bf16.msra.mxu0 0
    %2340 = vmatprep.subr.bf16.mxu0 0
    %2341 = vmatpush1.bf16.msra.mxu0 0
    %2342 = vmatprep.subr.bf16.mxu0 0
    %2343 = vmatpush1.bf16.msra.mxu0 0
    %2344 = vmatprep.subr.bf16.mxu0 0
    %2345 = vmatpush1.bf16.msra.mxu0 0
    %2346 = vmatprep.subr.bf16.mxu0 0
    %2347 = vmatpush1.bf16.msra.mxu0 0
    %2348 = vmatprep.subr.bf16.mxu0 0
    %2349 = vmatpush1.bf16.msra.mxu0 0
    %2350 = vmatprep.subr.bf16.mxu0 0
    %2351 = vmatpush1.bf16.msra.mxu0 0
    %2352 = vmatprep.subr.bf16.mxu0 0
    %2353 = vmatpush1.bf16.msra.mxu0 0
    %2354 = vmatprep.mubr.bf16.mxu0 0
    %2355 = vmatmul.mubr.bf16.gmra.mrb[0].mxu0 %v2320
    %v2356 = vpop.f32.mrb[0].mxu0
    %v2357 = vadd.f32 %v2297, %v2356
    %v2358 = vpop.f32.mrb[0].mxu0
    %v2359 = vpop.f32.mrb[0].mxu0
    %v2360 = vpop.f32.mrb[0].mxu0
    %2361 = vdwg.mxu0
    %v2362 = vtanh.pop %v2357
    %vm2363 = vcmask 254976
    %2364 = vst.msk [vmem:[#allocation2] sm:$0x3] %vm2363, %v2362
    // Predicated region
    $region74: #{text_encoder_forward.1} parent=1 // pred_check
      _
    $region75: #{text_encoder_forward.1} parent=1 // pred_check_branch
      %2366 = sbr.rel (0) target = $region77
    $region76: #{text_encoder_forward.1} parent=1 // pred_region
      %s2368 = ssub.s32 32, 32
      %2369 = vsyncadd [#allocation3], %s2368
      %s2371 = sshll.u32 [#allocation2], 4
      %s2372 = int_to_ptr.vmem [resolvable:$true] %s2371
      %2374 = dma.vmem_to_hbm [thread:$0]  %s2372, 32, %s18, [#allocation3]
    $region77: #{text_encoder_forward.1} parent=1 // pred_fallthru
      _
    // Predicated region
    $region78: #{text_encoder_forward.1} parent=1 // pred_check
      _
    $region79: #{text_encoder_forward.1} parent=1 // pred_check_branch
      %2376 = sbr.rel (0) target = $region81
    $region80: #{text_encoder_forward.1} parent=1 // pred_region
      %2377 = dma.done [#allocation3], 32
    $region81: #{text_encoder_forward.1} parent=1 // pred_fallthru
      _
    %2378 = vsyncpa [#allocation3], 1

</llo_original>
